<compile_context>
chip_gen: v5e
topology: v5e:2x2
jax: 0.10.0
libtpu: 0.0.40
codegen_flags: <defaults>
</compile_context>

<pallas_src>
import jax
import jax.numpy as jnp
from jax.experimental import pallas as pl
from jax.experimental.pallas import tpu as pltpu


def _round_up(n, m):
    return ((n + m - 1) // m) * m


def make_gru_fc_kernel(T, Bp, Dp, H):
    """Build the kernel with static shapes / packed-slab offsets baked in."""
    H2, H3, H4 = 2 * H, 3 * H, 4 * H
    o_w0h = Dp                 # layer-0 recurrent weights
    o_w1 = Dp + H              # layer-1 stacked weights ([x rows; h rows])
    o_wfc = Dp + 3 * H         # fc weights ([h rows; xt rows])
    o_b = 2 * Dp + 4 * H       # bias rows: b0, b1, bfc

    def kernel(data_ref, w_ref, out_ref):
        # Single packed parameter slab -> one HBM->VMEM DMA; slice it once here.
        w = w_ref[...]
        w0_in = w[0:Dp]                        # (Dp, 4H) cols [W_ir | W_iz | W_in | 0]
        w0_h = w[o_w0h:o_w0h + H]              # (H, 4H)  cols [W_hr | W_hz | 0 | W_hn]
        w1_x = w[o_w1:o_w1 + H]                # (H, 4H)  cols [W_ir | W_iz | W_in | 0]
        w1_h = w[o_w1 + H:o_w1 + 2 * H]        # (H, 4H)  cols [W_hr | W_hz | 0 | W_hn]
        wfc_h = w[o_wfc:o_wfc + H]             # (H, 4H)  cols [fc_w(h) | 0]
        wfc_x = w[o_wfc + H:o_wfc + H + Dp]    # (Dp, 4H) row 0 = fc_w(xt), rest 0
        b0 = w[o_b:o_b + 1]                    # (1, 4H) [bir+bhr | biz+bhz | bin | bhn]
        b1 = w[o_b + 1:o_b + 2]
        bfc = w[o_b + 2:o_b + 3]

        data = data_ref[...]                   # ((T+1)*Bp, Dp), single DMA
        feat = data[0:T * Bp]                  # time-major features (zero padded)
        xt = data[T * Bp:(T + 1) * Bp]         # (Bp, Dp): col 0 = x[:, -1], rest 0

        # (1) Layer-0 input projection for ALL timesteps in one MXU op; all
        #     layer-0 biases folded in.  Output cols: [r | z | n_in | n_h].
        gi0 = jnp.dot(feat, w0_in, preferred_element_type=jnp.float32) + b0

        h0 = jnp.zeros((Bp, H), jnp.float32)
        h1 = jnp.zeros((Bp, H), jnp.float32)

        # (2) Fully unrolled recurrence (T static & tiny) for cross-step
        #     scheduling visibility.
        for t in range(T):
            # Layer-1 hidden half: depends only on the *previous* h1, so it is
            # scheduled off the serial critical path (overlaps layer-0 work).
            gh1 = jnp.dot(h1, w1_h, preferred_element_type=jnp.float32) + b1

            # --- layer 0: one 128-lane recurrent matmul + one full-vreg add ---
            g0 = gi0[t * Bp:(t + 1) * Bp] + jnp.dot(
                h0, w0_h, preferred_element_type=jnp.float32)
            rz0 = jax.nn.sigmoid(g0[:, 0:H2])
            n0 = jnp.tanh(g0[:, H2:H3] + rz0[:, 0:H] * g0[:, H3:H4])
            h0 = n0 + rz0[:, H:H2] * (h0 - n0)         # == (1-z)*n + z*h

            # --- layer 1: only the x-half matmul sits on the critical path ---
            g1 = jnp.dot(h0, w1_x, preferred_element_type=jnp.float32) + gh1
            rz1 = jax.nn.sigmoid(g1[:, 0:H2])
            n1 = jnp.tanh(g1[:, H2:H3] + rz1[:, 0:H] * g1[:, H3:H4])
            h1 = n1 + rz1[:, H:H2] * (h1 - n1)

        # fc_out(concat([h1, xt], 1)) == h1 @ Wfc_h + xt @ Wfc_x + b, output
        # padded to a full (Bp, 128) tile so the final store is unmasked.
        out = (jnp.dot(h1, wfc_h, preferred_element_type=jnp.float32)
               + jnp.dot(xt, wfc_x, preferred_element_type=jnp.float32)
               + bfc)
        out_ref[...] = out.astype(out_ref.dtype)

    return kernel


def make_params(key, d_feat, hidden_size, action_size):
    """Deterministic init, shapes matching nn.GRU(num_layers=2) + nn.Linear."""
    ks = jax.random.split(key, 12)
    bound = 1.0 / jnp.sqrt(hidden_size)

    def u(k, shape):
        return jax.random.uniform(k, shape, jnp.float32, -bound, bound)

    return {
        # layer 0
        "w_ih_l0": u(ks[0], (3 * hidden_size, d_feat)),
        "w_hh_l0": u(ks[1], (3 * hidden_size, hidden_size)),
        "b_ih_l0": u(ks[2], (3 * hidden_size,)),
        "b_hh_l0": u(ks[3], (3 * hidden_size,)),
        # layer 1
        "w_ih_l1": u(ks[4], (3 * hidden_size, hidden_size)),
        "w_hh_l1": u(ks[5], (3 * hidden_size, hidden_size)),
        "b_ih_l1": u(ks[6], (3 * hidden_size,)),
        "b_hh_l1": u(ks[7], (3 * hidden_size,)),
        # fc_out: Linear(hidden_size + 1, action_size)
        "fc_w": u(ks[8], (action_size, hidden_size + 1)),
        "fc_b": u(ks[9], (action_size,)),
    }


def gru_model_forward(x, params, d_feat, hidden_size, action_size):
    """Pallas-backed forward matching GRUModel.forward (PyTorch semantics)."""
    B = x.shape[0]
    H, A = hidden_size, action_size
    H2, H3, H4 = 2 * H, 3 * H, 4 * H
    assert A <= H4, "fc output is packed into the 4H-lane tile"

    feature = x[:, :-1]                                    # (B, d_feat*T)
    xt = x[:, -1:]                                         # (B, 1)
    T = feature.shape[1] // d_feat

    Bp = _round_up(B, 8)                                   # sublane pad
    Dp = _round_up(d_feat, 8)                              # input-dim pad

    # ---- activations: one slab ((T+1)*Bp, Dp) -> single DMA ----
    feat = jnp.transpose(feature.reshape(B, d_feat, T), (0, 2, 1))   # (B, T, D)
    feat = jnp.transpose(feat, (1, 0, 2))                            # (T, B, D)
    feat_p = jnp.zeros((T, Bp, Dp), jnp.float32).at[:, :B, :d_feat].set(feat)
    xt_p = jnp.zeros((Bp, Dp), jnp.float32).at[:B, 0:1].set(xt)
    data = jnp.concatenate([feat_p.reshape(T * Bp, Dp), xt_p], axis=0)

    # ---- parameters: one packed slab (2*Dp + 4H + 8, 4H) -> single DMA ----
    wih0, whh0 = params["w_ih_l0"], params["w_hh_l0"]
    wih1, whh1 = params["w_ih_l1"], params["w_hh_l1"]
    bih0, bhh0 = params["b_ih_l0"], params["b_hh_l0"]
    bih1, bhh1 = params["b_ih_l1"], params["b_hh_l1"]
    fcw, fcb = params["fc_w"], params["fc_b"]

    # gate-stacked blocks, columns [r | z | n_in | n_h] (each H wide)
    w0_in = jnp.zeros((Dp, H4), jnp.float32).at[:d_feat, 0:H3].set(wih0.T)
    w0_h = (jnp.zeros((H, H4), jnp.float32)
            .at[:, 0:H2].set(whh0[0:H2].T)
            .at[:, H3:H4].set(whh0[H2:H3].T))
    w1 = (jnp.zeros((2 * H, H4), jnp.float32)
          .at[0:H, 0:H2].set(wih1[0:H2].T)          # x rows: r,z
          .at[0:H, H2:H3].set(wih1[H2:H3].T)        # x rows: n_in
          .at[H:2 * H, 0:H2].set(whh1[0:H2].T)      # h rows: r,z
          .at[H:2 * H, H3:H4].set(whh1[H2:H3].T))   # h rows: n_h
    wfc = (jnp.zeros((H + Dp, H4), jnp.float32)
           .at[0:H, 0:A].set(fcw[:, 0:H].T)         # h part
           .at[H, 0:A].set(fcw[:, H]))              # xt part (row 0 of xt block)

    # biases: r/z pre-summed (b_ih + b_hh); b_in in n_in col; b_hn in n_h col
    b0 = (jnp.zeros((H4,), jnp.float32)
          .at[0:H2].set(bih0[0:H2] + bhh0[0:H2])
          .at[H2:H3].set(bih0[H2:H3])
          .at[H3:H4].set(bhh0[H2:H3]))
    b1 = (jnp.zeros((H4,), jnp.float32)
          .at[0:H2].set(bih1[0:H2] + bhh1[0:H2])
          .at[H2:H3].set(bih1[H2:H3])
          .at[H3:H4].set(bhh1[H2:H3]))
    bfc = jnp.zeros((H4,), jnp.float32).at[0:A].set(fcb)
    bias_block = (jnp.zeros((8, H4), jnp.float32)
                  .at[0].set(b0).at[1].set(b1).at[2].set(bfc))

    wslab = jnp.concatenate([w0_in, w0_h, w1, wfc, bias_block], axis=0)

    vmem = pl.BlockSpec(memory_space=pltpu.MemorySpace.VMEM)
    out_p = pl.pallas_call(
        make_gru_fc_kernel(T, Bp, Dp, H),
        out_shape=jax.ShapeDtypeStruct((Bp, H4), jnp.float32),
        in_specs=[vmem, vmem],
        out_specs=vmem,
        # NOTE: no vmem_limit override — footprint is ~100 KiB, well under the
        # default scoped VMEM on v5e/v6e/v7x.  For production batch sizes, add
        # a grid over padded-batch chunks with dimension_semantics=("parallel",)
        # so both v7x TensorCores are used; pointless at B=2.
    )(data, wslab)
    return out_p[:B, :A]


def gru_model_reference(x, params, d_feat, hidden_size, action_size):
    """Pure-JAX reference for correctness checking (PyTorch GRU semantics)."""
    B = x.shape[0]
    feature = x[:, :-1]
    xt = x[:, -1:]
    T = feature.shape[1] // d_feat
    feature = jnp.transpose(feature.reshape(B, d_feat, T), (0, 2, 1))  # (B,T,D)
    H = hidden_size

    def cell(x_t, h, w_ih, w_hh, b_ih, b_hh):
        gi = x_t @ w_ih.T + b_ih
        gh = h @ w_hh.T + b_hh
        r = jax.nn.sigmoid(gi[:, :H] + gh[:, :H])
        z = jax.nn.sigmoid(gi[:, H:2 * H] + gh[:, H:2 * H])
        n = jnp.tanh(gi[:, 2 * H:] + r * gh[:, 2 * H:])
        return (1.0 - z) * n + z * h

    h0 = jnp.zeros((B, H), jnp.float32)
    h1 = jnp.zeros((B, H), jnp.float32)
    for t in range(T):
        h0 = cell(feature[:, t, :], h0, params["w_ih_l0"], params["w_hh_l0"],
                  params["b_ih_l0"], params["b_hh_l0"])
        h1 = cell(h0, h1, params["w_ih_l1"], params["w_hh_l1"],
                  params["b_ih_l1"], params["b_hh_l1"])
    cat = jnp.concatenate([h1, xt], axis=1)
    return cat @ params["fc_w"].T + params["fc_b"]


if __name__ == "__main__":
    # Small shapes consistent with the module: d_feat=6, T=8 timesteps,
    # hidden=32, 2 GRU layers, action_size=3, batch=2.
    B, D_FEAT, T, HIDDEN, ACTIONS = 2, 6, 8, 32, 3

    key = jax.random.PRNGKey(0)
    k_x, k_p = jax.random.split(key)
    x = jax.random.normal(k_x, (B, D_FEAT * T + 1), jnp.float32)
    params = make_params(k_p, D_FEAT, HIDDEN, ACTIONS)

    out = gru_model_forward(x, params, D_FEAT, HIDDEN, ACTIONS)
    out = jax.block_until_ready(out)

    ref = gru_model_reference(x, params, D_FEAT, HIDDEN, ACTIONS)
    assert out.shape == (B, ACTIONS)
    assert jnp.allclose(out, ref, atol=1e-4, rtol=1e-4), "mismatch vs JAX reference"

    print("KERNEL_OK")
</pallas_src>

<mosaic_0001>
module attributes {stable_mosaic.version = 11 : i64} {
  func.func @kernel(%arg0: memref<72x8xf32, #tpu.memory_space<vmem>>, %arg1: memref<152x128xf32, #tpu.memory_space<vmem>>, %arg2: memref<8x128xf32, #tpu.memory_space<vmem>>) attributes {dimension_semantics = [], scalar_prefetch = 0 : i64, scratch_operands = 0 : i64, tpu.core_type = #tpu.core_type<tc>} {
    %c0 = arith.constant 0 : index
    %c0_0 = arith.constant 0 : index
    %0 = vector.load %arg1[%c0, %c0_0] : memref<152x128xf32, #tpu.memory_space<vmem>>, vector<152x128xf32>
    %1 = vector.extract_strided_slice %0 {offsets = [0, 0], sizes = [8, 128], strides = [1, 1]} : vector<152x128xf32> to vector<8x128xf32>
    %2 = vector.extract_strided_slice %0 {offsets = [8, 0], sizes = [32, 128], strides = [1, 1]} : vector<152x128xf32> to vector<32x128xf32>
    %3 = vector.extract_strided_slice %0 {offsets = [40, 0], sizes = [32, 128], strides = [1, 1]} : vector<152x128xf32> to vector<32x128xf32>
    %4 = vector.extract_strided_slice %0 {offsets = [72, 0], sizes = [32, 128], strides = [1, 1]} : vector<152x128xf32> to vector<32x128xf32>
    %5 = vector.extract_strided_slice %0 {offsets = [104, 0], sizes = [32, 128], strides = [1, 1]} : vector<152x128xf32> to vector<32x128xf32>
    %6 = vector.extract_strided_slice %0 {offsets = [136, 0], sizes = [8, 128], strides = [1, 1]} : vector<152x128xf32> to vector<8x128xf32>
    %7 = vector.extract_strided_slice %0 {offsets = [144, 0], sizes = [1, 128], strides = [1, 1]} : vector<152x128xf32> to vector<1x128xf32>
    %8 = vector.extract_strided_slice %0 {offsets = [145, 0], sizes = [1, 128], strides = [1, 1]} : vector<152x128xf32> to vector<1x128xf32>
    %9 = vector.extract_strided_slice %0 {offsets = [146, 0], sizes = [1, 128], strides = [1, 1]} : vector<152x128xf32> to vector<1x128xf32>
    %c0_1 = arith.constant 0 : index
    %c0_2 = arith.constant 0 : index
    %10 = vector.load %arg0[%c0_1, %c0_2] : memref<72x8xf32, #tpu.memory_space<vmem>>, vector<72x8xf32>
    %11 = vector.extract_strided_slice %10 {offsets = [0, 0], sizes = [64, 8], strides = [1, 1]} : vector<72x8xf32> to vector<64x8xf32>
    %12 = vector.extract_strided_slice %10 {offsets = [64, 0], sizes = [8, 8], strides = [1, 1]} : vector<72x8xf32> to vector<8x8xf32>
    %cst = arith.constant dense<0.000000e+00> : vector<64x128xf32>
    %13 = tpu.matmul %11, %1, %cst {dimension_numbers = #tpu.dot_dimension_numbers<[1], [0], [0], [1], [0, 0, 1, 1], [], []>} : vector<64x8xf32>, vector<8x128xf32>, vector<64x128xf32> -> vector<64x128xf32>
    %14 = vector.broadcast %7 : vector<1x128xf32> to vector<64x128xf32>
    %15 = arith.addf %13, %14 : vector<64x128xf32>
    %cst_3 = arith.constant 0.000000e+00 : f32
    %16 = vector.broadcast %cst_3 : f32 to vector<8x32xf32>
    %cst_4 = arith.constant 0.000000e+00 : f32
    %17 = vector.broadcast %cst_4 : f32 to vector<8x32xf32>
    %cst_5 = arith.constant dense<0.000000e+00> : vector<8x128xf32>
    %18 = tpu.matmul %17, %4, %cst_5 {dimension_numbers = #tpu.dot_dimension_numbers<[1], [0], [0], [1], [0, 0, 1, 1], [], []>} : vector<8x32xf32>, vector<32x128xf32>, vector<8x128xf32> -> vector<8x128xf32>
    %19 = vector.broadcast %8 : vector<1x128xf32> to vector<8x128xf32>
    %20 = arith.addf %18, %19 : vector<8x128xf32>
    %21 = vector.extract_strided_slice %15 {offsets = [0, 0], sizes = [8, 128], strides = [1, 1]} : vector<64x128xf32> to vector<8x128xf32>
    %cst_6 = arith.constant dense<0.000000e+00> : vector<8x128xf32>
    %22 = tpu.matmul %16, %2, %cst_6 {dimension_numbers = #tpu.dot_dimension_numbers<[1], [0], [0], [1], [0, 0, 1, 1], [], []>} : vector<8x32xf32>, vector<32x128xf32>, vector<8x128xf32> -> vector<8x128xf32>
    %23 = arith.addf %21, %22 : vector<8x128xf32>
    %24 = vector.extract_strided_slice %23 {offsets = [0, 0], sizes = [8, 64], strides = [1, 1]} : vector<8x128xf32> to vector<8x64xf32>
    %25 = arith.negf %24 : vector<8x64xf32>
    %26 = math.exp %25 : vector<8x64xf32>
    %cst_7 = arith.constant 1.000000e+00 : f32
    %27 = vector.broadcast %cst_7 : f32 to vector<8x64xf32>
    %28 = arith.addf %27, %26 : vector<8x64xf32>
    %29 = arith.divf %27, %28 : vector<8x64xf32>
    %30 = vector.extract_strided_slice %23 {offsets = [0, 64], sizes = [8, 32], strides = [1, 1]} : vector<8x128xf32> to vector<8x32xf32>
    %31 = vector.extract_strided_slice %29 {offsets = [0, 0], sizes = [8, 32], strides = [1, 1]} : vector<8x64xf32> to vector<8x32xf32>
    %32 = vector.extract_strided_slice %23 {offsets = [0, 96], sizes = [8, 32], strides = [1, 1]} : vector<8x128xf32> to vector<8x32xf32>
    %33 = arith.mulf %31, %32 : vector<8x32xf32>
    %34 = arith.addf %30, %33 : vector<8x32xf32>
    %35 = math.tanh %34 : vector<8x32xf32>
    %36 = vector.extract_strided_slice %29 {offsets = [0, 32], sizes = [8, 32], strides = [1, 1]} : vector<8x64xf32> to vector<8x32xf32>
    %37 = arith.subf %16, %35 : vector<8x32xf32>
    %38 = arith.mulf %36, %37 : vector<8x32xf32>
    %39 = arith.addf %35, %38 : vector<8x32xf32>
    %cst_8 = arith.constant dense<0.000000e+00> : vector<8x128xf32>
    %40 = tpu.matmul %39, %3, %cst_8 {dimension_numbers = #tpu.dot_dimension_numbers<[1], [0], [0], [1], [0, 0, 1, 1], [], []>} : vector<8x32xf32>, vector<32x128xf32>, vector<8x128xf32> -> vector<8x128xf32>
    %41 = arith.addf %40, %20 : vector<8x128xf32>
    %42 = vector.extract_strided_slice %41 {offsets = [0, 0], sizes = [8, 64], strides = [1, 1]} : vector<8x128xf32> to vector<8x64xf32>
    %43 = arith.negf %42 : vector<8x64xf32>
    %44 = math.exp %43 : vector<8x64xf32>
    %cst_9 = arith.constant 1.000000e+00 : f32
    %45 = vector.broadcast %cst_9 : f32 to vector<8x64xf32>
    %46 = arith.addf %45, %44 : vector<8x64xf32>
    %47 = arith.divf %45, %46 : vector<8x64xf32>
    %48 = vector.extract_strided_slice %41 {offsets = [0, 64], sizes = [8, 32], strides = [1, 1]} : vector<8x128xf32> to vector<8x32xf32>
    %49 = vector.extract_strided_slice %47 {offsets = [0, 0], sizes = [8, 32], strides = [1, 1]} : vector<8x64xf32> to vector<8x32xf32>
    %50 = vector.extract_strided_slice %41 {offsets = [0, 96], sizes = [8, 32], strides = [1, 1]} : vector<8x128xf32> to vector<8x32xf32>
    %51 = arith.mulf %49, %50 : vector<8x32xf32>
    %52 = arith.addf %48, %51 : vector<8x32xf32>
    %53 = math.tanh %52 : vector<8x32xf32>
    %54 = vector.extract_strided_slice %47 {offsets = [0, 32], sizes = [8, 32], strides = [1, 1]} : vector<8x64xf32> to vector<8x32xf32>
    %55 = arith.subf %17, %53 : vector<8x32xf32>
    %56 = arith.mulf %54, %55 : vector<8x32xf32>
    %57 = arith.addf %53, %56 : vector<8x32xf32>
    %cst_10 = arith.constant dense<0.000000e+00> : vector<8x128xf32>
    %58 = tpu.matmul %57, %4, %cst_10 {dimension_numbers = #tpu.dot_dimension_numbers<[1], [0], [0], [1], [0, 0, 1, 1], [], []>} : vector<8x32xf32>, vector<32x128xf32>, vector<8x128xf32> -> vector<8x128xf32>
    %59 = vector.broadcast %8 : vector<1x128xf32> to vector<8x128xf32>
    %60 = arith.addf %58, %59 : vector<8x128xf32>
    %61 = vector.extract_strided_slice %15 {offsets = [8, 0], sizes = [8, 128], strides = [1, 1]} : vector<64x128xf32> to vector<8x128xf32>
    %cst_11 = arith.constant dense<0.000000e+00> : vector<8x128xf32>
    %62 = tpu.matmul %39, %2, %cst_11 {dimension_numbers = #tpu.dot_dimension_numbers<[1], [0], [0], [1], [0, 0, 1, 1], [], []>} : vector<8x32xf32>, vector<32x128xf32>, vector<8x128xf32> -> vector<8x128xf32>
    %63 = arith.addf %61, %62 : vector<8x128xf32>
    %64 = vector.extract_strided_slice %63 {offsets = [0, 0], sizes = [8, 64], strides = [1, 1]} : vector<8x128xf32> to vector<8x64xf32>
    %65 = arith.negf %64 : vector<8x64xf32>
    %66 = math.exp %65 : vector<8x64xf32>
    %cst_12 = arith.constant 1.000000e+00 : f32
    %67 = vector.broadcast %cst_12 : f32 to vector<8x64xf32>
    %68 = arith.addf %67, %66 : vector<8x64xf32>
    %69 = arith.divf %67, %68 : vector<8x64xf32>
    %70 = vector.extract_strided_slice %63 {offsets = [0, 64], sizes = [8, 32], strides = [1, 1]} : vector<8x128xf32> to vector<8x32xf32>
    %71 = vector.extract_strided_slice %69 {offsets = [0, 0], sizes = [8, 32], strides = [1, 1]} : vector<8x64xf32> to vector<8x32xf32>
    %72 = vector.extract_strided_slice %63 {offsets = [0, 96], sizes = [8, 32], strides = [1, 1]} : vector<8x128xf32> to vector<8x32xf32>
    %73 = arith.mulf %71, %72 : vector<8x32xf32>
    %74 = arith.addf %70, %73 : vector<8x32xf32>
    %75 = math.tanh %74 : vector<8x32xf32>
    %76 = vector.extract_strided_slice %69 {offsets = [0, 32], sizes = [8, 32], strides = [1, 1]} : vector<8x64xf32> to vector<8x32xf32>
    %77 = arith.subf %39, %75 : vector<8x32xf32>
    %78 = arith.mulf %76, %77 : vector<8x32xf32>
    %79 = arith.addf %75, %78 : vector<8x32xf32>
    %cst_13 = arith.constant dense<0.000000e+00> : vector<8x128xf32>
    %80 = tpu.matmul %79, %3, %cst_13 {dimension_numbers = #tpu.dot_dimension_numbers<[1], [0], [0], [1], [0, 0, 1, 1], [], []>} : vector<8x32xf32>, vector<32x128xf32>, vector<8x128xf32> -> vector<8x128xf32>
    %81 = arith.addf %80, %60 : vector<8x128xf32>
    %82 = vector.extract_strided_slice %81 {offsets = [0, 0], sizes = [8, 64], strides = [1, 1]} : vector<8x128xf32> to vector<8x64xf32>
    %83 = arith.negf %82 : vector<8x64xf32>
    %84 = math.exp %83 : vector<8x64xf32>
    %cst_14 = arith.constant 1.000000e+00 : f32
    %85 = vector.broadcast %cst_14 : f32 to vector<8x64xf32>
    %86 = arith.addf %85, %84 : vector<8x64xf32>
    %87 = arith.divf %85, %86 : vector<8x64xf32>
    %88 = vector.extract_strided_slice %81 {offsets = [0, 64], sizes = [8, 32], strides = [1, 1]} : vector<8x128xf32> to vector<8x32xf32>
    %89 = vector.extract_strided_slice %87 {offsets = [0, 0], sizes = [8, 32], strides = [1, 1]} : vector<8x64xf32> to vector<8x32xf32>
    %90 = vector.extract_strided_slice %81 {offsets = [0, 96], sizes = [8, 32], strides = [1, 1]} : vector<8x128xf32> to vector<8x32xf32>
    %91 = arith.mulf %89, %90 : vector<8x32xf32>
    %92 = arith.addf %88, %91 : vector<8x32xf32>
    %93 = math.tanh %92 : vector<8x32xf32>
    %94 = vector.extract_strided_slice %87 {offsets = [0, 32], sizes = [8, 32], strides = [1, 1]} : vector<8x64xf32> to vector<8x32xf32>
    %95 = arith.subf %57, %93 : vector<8x32xf32>
    %96 = arith.mulf %94, %95 : vector<8x32xf32>
    %97 = arith.addf %93, %96 : vector<8x32xf32>
    %cst_15 = arith.constant dense<0.000000e+00> : vector<8x128xf32>
    %98 = tpu.matmul %97, %4, %cst_15 {dimension_numbers = #tpu.dot_dimension_numbers<[1], [0], [0], [1], [0, 0, 1, 1], [], []>} : vector<8x32xf32>, vector<32x128xf32>, vector<8x128xf32> -> vector<8x128xf32>
    %99 = vector.broadcast %8 : vector<1x128xf32> to vector<8x128xf32>
    %100 = arith.addf %98, %99 : vector<8x128xf32>
    %101 = vector.extract_strided_slice %15 {offsets = [16, 0], sizes = [8, 128], strides = [1, 1]} : vector<64x128xf32> to vector<8x128xf32>
    %cst_16 = arith.constant dense<0.000000e+00> : vector<8x128xf32>
    %102 = tpu.matmul %79, %2, %cst_16 {dimension_numbers = #tpu.dot_dimension_numbers<[1], [0], [0], [1], [0, 0, 1, 1], [], []>} : vector<8x32xf32>, vector<32x128xf32>, vector<8x128xf32> -> vector<8x128xf32>
    %103 = arith.addf %101, %102 : vector<8x128xf32>
    %104 = vector.extract_strided_slice %103 {offsets = [0, 0], sizes = [8, 64], strides = [1, 1]} : vector<8x128xf32> to vector<8x64xf32>
    %105 = arith.negf %104 : vector<8x64xf32>
    %106 = math.exp %105 : vector<8x64xf32>
    %cst_17 = arith.constant 1.000000e+00 : f32
    %107 = vector.broadcast %cst_17 : f32 to vector<8x64xf32>
    %108 = arith.addf %107, %106 : vector<8x64xf32>
    %109 = arith.divf %107, %108 : vector<8x64xf32>
    %110 = vector.extract_strided_slice %103 {offsets = [0, 64], sizes = [8, 32], strides = [1, 1]} : vector<8x128xf32> to vector<8x32xf32>
    %111 = vector.extract_strided_slice %109 {offsets = [0, 0], sizes = [8, 32], strides = [1, 1]} : vector<8x64xf32> to vector<8x32xf32>
    %112 = vector.extract_strided_slice %103 {offsets = [0, 96], sizes = [8, 32], strides = [1, 1]} : vector<8x128xf32> to vector<8x32xf32>
    %113 = arith.mulf %111, %112 : vector<8x32xf32>
    %114 = arith.addf %110, %113 : vector<8x32xf32>
    %115 = math.tanh %114 : vector<8x32xf32>
    %116 = vector.extract_strided_slice %109 {offsets = [0, 32], sizes = [8, 32], strides = [1, 1]} : vector<8x64xf32> to vector<8x32xf32>
    %117 = arith.subf %79, %115 : vector<8x32xf32>
    %118 = arith.mulf %116, %117 : vector<8x32xf32>
    %119 = arith.addf %115, %118 : vector<8x32xf32>
    %cst_18 = arith.constant dense<0.000000e+00> : vector<8x128xf32>
    %120 = tpu.matmul %119, %3, %cst_18 {dimension_numbers = #tpu.dot_dimension_numbers<[1], [0], [0], [1], [0, 0, 1, 1], [], []>} : vector<8x32xf32>, vector<32x128xf32>, vector<8x128xf32> -> vector<8x128xf32>
    %121 = arith.addf %120, %100 : vector<8x128xf32>
    %122 = vector.extract_strided_slice %121 {offsets = [0, 0], sizes = [8, 64], strides = [1, 1]} : vector<8x128xf32> to vector<8x64xf32>
    %123 = arith.negf %122 : vector<8x64xf32>
    %124 = math.exp %123 : vector<8x64xf32>
    %cst_19 = arith.constant 1.000000e+00 : f32
    %125 = vector.broadcast %cst_19 : f32 to vector<8x64xf32>
    %126 = arith.addf %125, %124 : vector<8x64xf32>
    %127 = arith.divf %125, %126 : vector<8x64xf32>
    %128 = vector.extract_strided_slice %121 {offsets = [0, 64], sizes = [8, 32], strides = [1, 1]} : vector<8x128xf32> to vector<8x32xf32>
    %129 = vector.extract_strided_slice %127 {offsets = [0, 0], sizes = [8, 32], strides = [1, 1]} : vector<8x64xf32> to vector<8x32xf32>
    %130 = vector.extract_strided_slice %121 {offsets = [0, 96], sizes = [8, 32], strides = [1, 1]} : vector<8x128xf32> to vector<8x32xf32>
    %131 = arith.mulf %129, %130 : vector<8x32xf32>
    %132 = arith.addf %128, %131 : vector<8x32xf32>
    %133 = math.tanh %132 : vector<8x32xf32>
    %134 = vector.extract_strided_slice %127 {offsets = [0, 32], sizes = [8, 32], strides = [1, 1]} : vector<8x64xf32> to vector<8x32xf32>
    %135 = arith.subf %97, %133 : vector<8x32xf32>
    %136 = arith.mulf %134, %135 : vector<8x32xf32>
    %137 = arith.addf %133, %136 : vector<8x32xf32>
    %cst_20 = arith.constant dense<0.000000e+00> : vector<8x128xf32>
    %138 = tpu.matmul %137, %4, %cst_20 {dimension_numbers = #tpu.dot_dimension_numbers<[1], [0], [0], [1], [0, 0, 1, 1], [], []>} : vector<8x32xf32>, vector<32x128xf32>, vector<8x128xf32> -> vector<8x128xf32>
    %139 = vector.broadcast %8 : vector<1x128xf32> to vector<8x128xf32>
    %140 = arith.addf %138, %139 : vector<8x128xf32>
    %141 = vector.extract_strided_slice %15 {offsets = [24, 0], sizes = [8, 128], strides = [1, 1]} : vector<64x128xf32> to vector<8x128xf32>
    %cst_21 = arith.constant dense<0.000000e+00> : vector<8x128xf32>
    %142 = tpu.matmul %119, %2, %cst_21 {dimension_numbers = #tpu.dot_dimension_numbers<[1], [0], [0], [1], [0, 0, 1, 1], [], []>} : vector<8x32xf32>, vector<32x128xf32>, vector<8x128xf32> -> vector<8x128xf32>
    %143 = arith.addf %141, %142 : vector<8x128xf32>
    %144 = vector.extract_strided_slice %143 {offsets = [0, 0], sizes = [8, 64], strides = [1, 1]} : vector<8x128xf32> to vector<8x64xf32>
    %145 = arith.negf %144 : vector<8x64xf32>
    %146 = math.exp %145 : vector<8x64xf32>
    %cst_22 = arith.constant 1.000000e+00 : f32
    %147 = vector.broadcast %cst_22 : f32 to vector<8x64xf32>
    %148 = arith.addf %147, %146 : vector<8x64xf32>
    %149 = arith.divf %147, %148 : vector<8x64xf32>
    %150 = vector.extract_strided_slice %143 {offsets = [0, 64], sizes = [8, 32], strides = [1, 1]} : vector<8x128xf32> to vector<8x32xf32>
    %151 = vector.extract_strided_slice %149 {offsets = [0, 0], sizes = [8, 32], strides = [1, 1]} : vector<8x64xf32> to vector<8x32xf32>
    %152 = vector.extract_strided_slice %143 {offsets = [0, 96], sizes = [8, 32], strides = [1, 1]} : vector<8x128xf32> to vector<8x32xf32>
    %153 = arith.mulf %151, %152 : vector<8x32xf32>
    %154 = arith.addf %150, %153 : vector<8x32xf32>
    %155 = math.tanh %154 : vector<8x32xf32>
    %156 = vector.extract_strided_slice %149 {offsets = [0, 32], sizes = [8, 32], strides = [1, 1]} : vector<8x64xf32> to vector<8x32xf32>
    %157 = arith.subf %119, %155 : vector<8x32xf32>
    %158 = arith.mulf %156, %157 : vector<8x32xf32>
    %159 = arith.addf %155, %158 : vector<8x32xf32>
    %cst_23 = arith.constant dense<0.000000e+00> : vector<8x128xf32>
    %160 = tpu.matmul %159, %3, %cst_23 {dimension_numbers = #tpu.dot_dimension_numbers<[1], [0], [0], [1], [0, 0, 1, 1], [], []>} : vector<8x32xf32>, vector<32x128xf32>, vector<8x128xf32> -> vector<8x128xf32>
    %161 = arith.addf %160, %140 : vector<8x128xf32>
    %162 = vector.extract_strided_slice %161 {offsets = [0, 0], sizes = [8, 64], strides = [1, 1]} : vector<8x128xf32> to vector<8x64xf32>
    %163 = arith.negf %162 : vector<8x64xf32>
    %164 = math.exp %163 : vector<8x64xf32>
    %cst_24 = arith.constant 1.000000e+00 : f32
    %165 = vector.broadcast %cst_24 : f32 to vector<8x64xf32>
    %166 = arith.addf %165, %164 : vector<8x64xf32>
    %167 = arith.divf %165, %166 : vector<8x64xf32>
    %168 = vector.extract_strided_slice %161 {offsets = [0, 64], sizes = [8, 32], strides = [1, 1]} : vector<8x128xf32> to vector<8x32xf32>
    %169 = vector.extract_strided_slice %167 {offsets = [0, 0], sizes = [8, 32], strides = [1, 1]} : vector<8x64xf32> to vector<8x32xf32>
    %170 = vector.extract_strided_slice %161 {offsets = [0, 96], sizes = [8, 32], strides = [1, 1]} : vector<8x128xf32> to vector<8x32xf32>
    %171 = arith.mulf %169, %170 : vector<8x32xf32>
    %172 = arith.addf %168, %171 : vector<8x32xf32>
    %173 = math.tanh %172 : vector<8x32xf32>
    %174 = vector.extract_strided_slice %167 {offsets = [0, 32], sizes = [8, 32], strides = [1, 1]} : vector<8x64xf32> to vector<8x32xf32>
    %175 = arith.subf %137, %173 : vector<8x32xf32>
    %176 = arith.mulf %174, %175 : vector<8x32xf32>
    %177 = arith.addf %173, %176 : vector<8x32xf32>
    %cst_25 = arith.constant dense<0.000000e+00> : vector<8x128xf32>
    %178 = tpu.matmul %177, %4, %cst_25 {dimension_numbers = #tpu.dot_dimension_numbers<[1], [0], [0], [1], [0, 0, 1, 1], [], []>} : vector<8x32xf32>, vector<32x128xf32>, vector<8x128xf32> -> vector<8x128xf32>
    %179 = vector.broadcast %8 : vector<1x128xf32> to vector<8x128xf32>
    %180 = arith.addf %178, %179 : vector<8x128xf32>
    %181 = vector.extract_strided_slice %15 {offsets = [32, 0], sizes = [8, 128], strides = [1, 1]} : vector<64x128xf32> to vector<8x128xf32>
    %cst_26 = arith.constant dense<0.000000e+00> : vector<8x128xf32>
    %182 = tpu.matmul %159, %2, %cst_26 {dimension_numbers = #tpu.dot_dimension_numbers<[1], [0], [0], [1], [0, 0, 1, 1], [], []>} : vector<8x32xf32>, vector<32x128xf32>, vector<8x128xf32> -> vector<8x128xf32>
    %183 = arith.addf %181, %182 : vector<8x128xf32>
    %184 = vector.extract_strided_slice %183 {offsets = [0, 0], sizes = [8, 64], strides = [1, 1]} : vector<8x128xf32> to vector<8x64xf32>
    %185 = arith.negf %184 : vector<8x64xf32>
    %186 = math.exp %185 : vector<8x64xf32>
    %cst_27 = arith.constant 1.000000e+00 : f32
    %187 = vector.broadcast %cst_27 : f32 to vector<8x64xf32>
    %188 = arith.addf %187, %186 : vector<8x64xf32>
    %189 = arith.divf %187, %188 : vector<8x64xf32>
    %190 = vector.extract_strided_slice %183 {offsets = [0, 64], sizes = [8, 32], strides = [1, 1]} : vector<8x128xf32> to vector<8x32xf32>
    %191 = vector.extract_strided_slice %189 {offsets = [0, 0], sizes = [8, 32], strides = [1, 1]} : vector<8x64xf32> to vector<8x32xf32>
    %192 = vector.extract_strided_slice %183 {offsets = [0, 96], sizes = [8, 32], strides = [1, 1]} : vector<8x128xf32> to vector<8x32xf32>
    %193 = arith.mulf %191, %192 : vector<8x32xf32>
    %194 = arith.addf %190, %193 : vector<8x32xf32>
    %195 = math.tanh %194 : vector<8x32xf32>
    %196 = vector.extract_strided_slice %189 {offsets = [0, 32], sizes = [8, 32], strides = [1, 1]} : vector<8x64xf32> to vector<8x32xf32>
    %197 = arith.subf %159, %195 : vector<8x32xf32>
    %198 = arith.mulf %196, %197 : vector<8x32xf32>
    %199 = arith.addf %195, %198 : vector<8x32xf32>
    %cst_28 = arith.constant dense<0.000000e+00> : vector<8x128xf32>
    %200 = tpu.matmul %199, %3, %cst_28 {dimension_numbers = #tpu.dot_dimension_numbers<[1], [0], [0], [1], [0, 0, 1, 1], [], []>} : vector<8x32xf32>, vector<32x128xf32>, vector<8x128xf32> -> vector<8x128xf32>
    %201 = arith.addf %200, %180 : vector<8x128xf32>
    %202 = vector.extract_strided_slice %201 {offsets = [0, 0], sizes = [8, 64], strides = [1, 1]} : vector<8x128xf32> to vector<8x64xf32>
    %203 = arith.negf %202 : vector<8x64xf32>
    %204 = math.exp %203 : vector<8x64xf32>
    %cst_29 = arith.constant 1.000000e+00 : f32
    %205 = vector.broadcast %cst_29 : f32 to vector<8x64xf32>
    %206 = arith.addf %205, %204 : vector<8x64xf32>
    %207 = arith.divf %205, %206 : vector<8x64xf32>
    %208 = vector.extract_strided_slice %201 {offsets = [0, 64], sizes = [8, 32], strides = [1, 1]} : vector<8x128xf32> to vector<8x32xf32>
    %209 = vector.extract_strided_slice %207 {offsets = [0, 0], sizes = [8, 32], strides = [1, 1]} : vector<8x64xf32> to vector<8x32xf32>
    %210 = vector.extract_strided_slice %201 {offsets = [0, 96], sizes = [8, 32], strides = [1, 1]} : vector<8x128xf32> to vector<8x32xf32>
    %211 = arith.mulf %209, %210 : vector<8x32xf32>
    %212 = arith.addf %208, %211 : vector<8x32xf32>
    %213 = math.tanh %212 : vector<8x32xf32>
    %214 = vector.extract_strided_slice %207 {offsets = [0, 32], sizes = [8, 32], strides = [1, 1]} : vector<8x64xf32> to vector<8x32xf32>
    %215 = arith.subf %177, %213 : vector<8x32xf32>
    %216 = arith.mulf %214, %215 : vector<8x32xf32>
    %217 = arith.addf %213, %216 : vector<8x32xf32>
    %cst_30 = arith.constant dense<0.000000e+00> : vector<8x128xf32>
    %218 = tpu.matmul %217, %4, %cst_30 {dimension_numbers = #tpu.dot_dimension_numbers<[1], [0], [0], [1], [0, 0, 1, 1], [], []>} : vector<8x32xf32>, vector<32x128xf32>, vector<8x128xf32> -> vector<8x128xf32>
    %219 = vector.broadcast %8 : vector<1x128xf32> to vector<8x128xf32>
    %220 = arith.addf %218, %219 : vector<8x128xf32>
    %221 = vector.extract_strided_slice %15 {offsets = [40, 0], sizes = [8, 128], strides = [1, 1]} : vector<64x128xf32> to vector<8x128xf32>
    %cst_31 = arith.constant dense<0.000000e+00> : vector<8x128xf32>
    %222 = tpu.matmul %199, %2, %cst_31 {dimension_numbers = #tpu.dot_dimension_numbers<[1], [0], [0], [1], [0, 0, 1, 1], [], []>} : vector<8x32xf32>, vector<32x128xf32>, vector<8x128xf32> -> vector<8x128xf32>
    %223 = arith.addf %221, %222 : vector<8x128xf32>
    %224 = vector.extract_strided_slice %223 {offsets = [0, 0], sizes = [8, 64], strides = [1, 1]} : vector<8x128xf32> to vector<8x64xf32>
    %225 = arith.negf %224 : vector<8x64xf32>
    %226 = math.exp %225 : vector<8x64xf32>
    %cst_32 = arith.constant 1.000000e+00 : f32
    %227 = vector.broadcast %cst_32 : f32 to vector<8x64xf32>
    %228 = arith.addf %227, %226 : vector<8x64xf32>
    %229 = arith.divf %227, %228 : vector<8x64xf32>
    %230 = vector.extract_strided_slice %223 {offsets = [0, 64], sizes = [8, 32], strides = [1, 1]} : vector<8x128xf32> to vector<8x32xf32>
    %231 = vector.extract_strided_slice %229 {offsets = [0, 0], sizes = [8, 32], strides = [1, 1]} : vector<8x64xf32> to vector<8x32xf32>
    %232 = vector.extract_strided_slice %223 {offsets = [0, 96], sizes = [8, 32], strides = [1, 1]} : vector<8x128xf32> to vector<8x32xf32>
    %233 = arith.mulf %231, %232 : vector<8x32xf32>
    %234 = arith.addf %230, %233 : vector<8x32xf32>
    %235 = math.tanh %234 : vector<8x32xf32>
    %236 = vector.extract_strided_slice %229 {offsets = [0, 32], sizes = [8, 32], strides = [1, 1]} : vector<8x64xf32> to vector<8x32xf32>
    %237 = arith.subf %199, %235 : vector<8x32xf32>
    %238 = arith.mulf %236, %237 : vector<8x32xf32>
    %239 = arith.addf %235, %238 : vector<8x32xf32>
    %cst_33 = arith.constant dense<0.000000e+00> : vector<8x128xf32>
    %240 = tpu.matmul %239, %3, %cst_33 {dimension_numbers = #tpu.dot_dimension_numbers<[1], [0], [0], [1], [0, 0, 1, 1], [], []>} : vector<8x32xf32>, vector<32x128xf32>, vector<8x128xf32> -> vector<8x128xf32>
    %241 = arith.addf %240, %220 : vector<8x128xf32>
    %242 = vector.extract_strided_slice %241 {offsets = [0, 0], sizes = [8, 64], strides = [1, 1]} : vector<8x128xf32> to vector<8x64xf32>
    %243 = arith.negf %242 : vector<8x64xf32>
    %244 = math.exp %243 : vector<8x64xf32>
    %cst_34 = arith.constant 1.000000e+00 : f32
    %245 = vector.broadcast %cst_34 : f32 to vector<8x64xf32>
    %246 = arith.addf %245, %244 : vector<8x64xf32>
    %247 = arith.divf %245, %246 : vector<8x64xf32>
    %248 = vector.extract_strided_slice %241 {offsets = [0, 64], sizes = [8, 32], strides = [1, 1]} : vector<8x128xf32> to vector<8x32xf32>
    %249 = vector.extract_strided_slice %247 {offsets = [0, 0], sizes = [8, 32], strides = [1, 1]} : vector<8x64xf32> to vector<8x32xf32>
    %250 = vector.extract_strided_slice %241 {offsets = [0, 96], sizes = [8, 32], strides = [1, 1]} : vector<8x128xf32> to vector<8x32xf32>
    %251 = arith.mulf %249, %250 : vector<8x32xf32>
    %252 = arith.addf %248, %251 : vector<8x32xf32>
    %253 = math.tanh %252 : vector<8x32xf32>
    %254 = vector.extract_strided_slice %247 {offsets = [0, 32], sizes = [8, 32], strides = [1, 1]} : vector<8x64xf32> to vector<8x32xf32>
    %255 = arith.subf %217, %253 : vector<8x32xf32>
    %256 = arith.mulf %254, %255 : vector<8x32xf32>
    %257 = arith.addf %253, %256 : vector<8x32xf32>
    %cst_35 = arith.constant dense<0.000000e+00> : vector<8x128xf32>
    %258 = tpu.matmul %257, %4, %cst_35 {dimension_numbers = #tpu.dot_dimension_numbers<[1], [0], [0], [1], [0, 0, 1, 1], [], []>} : vector<8x32xf32>, vector<32x128xf32>, vector<8x128xf32> -> vector<8x128xf32>
    %259 = vector.broadcast %8 : vector<1x128xf32> to vector<8x128xf32>
    %260 = arith.addf %258, %259 : vector<8x128xf32>
    %261 = vector.extract_strided_slice %15 {offsets = [48, 0], sizes = [8, 128], strides = [1, 1]} : vector<64x128xf32> to vector<8x128xf32>
    %cst_36 = arith.constant dense<0.000000e+00> : vector<8x128xf32>
    %262 = tpu.matmul %239, %2, %cst_36 {dimension_numbers = #tpu.dot_dimension_numbers<[1], [0], [0], [1], [0, 0, 1, 1], [], []>} : vector<8x32xf32>, vector<32x128xf32>, vector<8x128xf32> -> vector<8x128xf32>
    %263 = arith.addf %261, %262 : vector<8x128xf32>
    %264 = vector.extract_strided_slice %263 {offsets = [0, 0], sizes = [8, 64], strides = [1, 1]} : vector<8x128xf32> to vector<8x64xf32>
    %265 = arith.negf %264 : vector<8x64xf32>
    %266 = math.exp %265 : vector<8x64xf32>
    %cst_37 = arith.constant 1.000000e+00 : f32
    %267 = vector.broadcast %cst_37 : f32 to vector<8x64xf32>
    %268 = arith.addf %267, %266 : vector<8x64xf32>
    %269 = arith.divf %267, %268 : vector<8x64xf32>
    %270 = vector.extract_strided_slice %263 {offsets = [0, 64], sizes = [8, 32], strides = [1, 1]} : vector<8x128xf32> to vector<8x32xf32>
    %271 = vector.extract_strided_slice %269 {offsets = [0, 0], sizes = [8, 32], strides = [1, 1]} : vector<8x64xf32> to vector<8x32xf32>
    %272 = vector.extract_strided_slice %263 {offsets = [0, 96], sizes = [8, 32], strides = [1, 1]} : vector<8x128xf32> to vector<8x32xf32>
    %273 = arith.mulf %271, %272 : vector<8x32xf32>
    %274 = arith.addf %270, %273 : vector<8x32xf32>
    %275 = math.tanh %274 : vector<8x32xf32>
    %276 = vector.extract_strided_slice %269 {offsets = [0, 32], sizes = [8, 32], strides = [1, 1]} : vector<8x64xf32> to vector<8x32xf32>
    %277 = arith.subf %239, %275 : vector<8x32xf32>
    %278 = arith.mulf %276, %277 : vector<8x32xf32>
    %279 = arith.addf %275, %278 : vector<8x32xf32>
    %cst_38 = arith.constant dense<0.000000e+00> : vector<8x128xf32>
    %280 = tpu.matmul %279, %3, %cst_38 {dimension_numbers = #tpu.dot_dimension_numbers<[1], [0], [0], [1], [0, 0, 1, 1], [], []>} : vector<8x32xf32>, vector<32x128xf32>, vector<8x128xf32> -> vector<8x128xf32>
    %281 = arith.addf %280, %260 : vector<8x128xf32>
    %282 = vector.extract_strided_slice %281 {offsets = [0, 0], sizes = [8, 64], strides = [1, 1]} : vector<8x128xf32> to vector<8x64xf32>
    %283 = arith.negf %282 : vector<8x64xf32>
    %284 = math.exp %283 : vector<8x64xf32>
    %cst_39 = arith.constant 1.000000e+00 : f32
    %285 = vector.broadcast %cst_39 : f32 to vector<8x64xf32>
    %286 = arith.addf %285, %284 : vector<8x64xf32>
    %287 = arith.divf %285, %286 : vector<8x64xf32>
    %288 = vector.extract_strided_slice %281 {offsets = [0, 64], sizes = [8, 32], strides = [1, 1]} : vector<8x128xf32> to vector<8x32xf32>
    %289 = vector.extract_strided_slice %287 {offsets = [0, 0], sizes = [8, 32], strides = [1, 1]} : vector<8x64xf32> to vector<8x32xf32>
    %290 = vector.extract_strided_slice %281 {offsets = [0, 96], sizes = [8, 32], strides = [1, 1]} : vector<8x128xf32> to vector<8x32xf32>
    %291 = arith.mulf %289, %290 : vector<8x32xf32>
    %292 = arith.addf %288, %291 : vector<8x32xf32>
    %293 = math.tanh %292 : vector<8x32xf32>
    %294 = vector.extract_strided_slice %287 {offsets = [0, 32], sizes = [8, 32], strides = [1, 1]} : vector<8x64xf32> to vector<8x32xf32>
    %295 = arith.subf %257, %293 : vector<8x32xf32>
    %296 = arith.mulf %294, %295 : vector<8x32xf32>
    %297 = arith.addf %293, %296 : vector<8x32xf32>
    %cst_40 = arith.constant dense<0.000000e+00> : vector<8x128xf32>
    %298 = tpu.matmul %297, %4, %cst_40 {dimension_numbers = #tpu.dot_dimension_numbers<[1], [0], [0], [1], [0, 0, 1, 1], [], []>} : vector<8x32xf32>, vector<32x128xf32>, vector<8x128xf32> -> vector<8x128xf32>
    %299 = vector.broadcast %8 : vector<1x128xf32> to vector<8x128xf32>
    %300 = arith.addf %298, %299 : vector<8x128xf32>
    %301 = vector.extract_strided_slice %15 {offsets = [56, 0], sizes = [8, 128], strides = [1, 1]} : vector<64x128xf32> to vector<8x128xf32>
    %cst_41 = arith.constant dense<0.000000e+00> : vector<8x128xf32>
    %302 = tpu.matmul %279, %2, %cst_41 {dimension_numbers = #tpu.dot_dimension_numbers<[1], [0], [0], [1], [0, 0, 1, 1], [], []>} : vector<8x32xf32>, vector<32x128xf32>, vector<8x128xf32> -> vector<8x128xf32>
    %303 = arith.addf %301, %302 : vector<8x128xf32>
    %304 = vector.extract_strided_slice %303 {offsets = [0, 0], sizes = [8, 64], strides = [1, 1]} : vector<8x128xf32> to vector<8x64xf32>
    %305 = arith.negf %304 : vector<8x64xf32>
    %306 = math.exp %305 : vector<8x64xf32>
    %cst_42 = arith.constant 1.000000e+00 : f32
    %307 = vector.broadcast %cst_42 : f32 to vector<8x64xf32>
    %308 = arith.addf %307, %306 : vector<8x64xf32>
    %309 = arith.divf %307, %308 : vector<8x64xf32>
    %310 = vector.extract_strided_slice %303 {offsets = [0, 64], sizes = [8, 32], strides = [1, 1]} : vector<8x128xf32> to vector<8x32xf32>
    %311 = vector.extract_strided_slice %309 {offsets = [0, 0], sizes = [8, 32], strides = [1, 1]} : vector<8x64xf32> to vector<8x32xf32>
    %312 = vector.extract_strided_slice %303 {offsets = [0, 96], sizes = [8, 32], strides = [1, 1]} : vector<8x128xf32> to vector<8x32xf32>
    %313 = arith.mulf %311, %312 : vector<8x32xf32>
    %314 = arith.addf %310, %313 : vector<8x32xf32>
    %315 = math.tanh %314 : vector<8x32xf32>
    %316 = vector.extract_strided_slice %309 {offsets = [0, 32], sizes = [8, 32], strides = [1, 1]} : vector<8x64xf32> to vector<8x32xf32>
    %317 = arith.subf %279, %315 : vector<8x32xf32>
    %318 = arith.mulf %316, %317 : vector<8x32xf32>
    %319 = arith.addf %315, %318 : vector<8x32xf32>
    %cst_43 = arith.constant dense<0.000000e+00> : vector<8x128xf32>
    %320 = tpu.matmul %319, %3, %cst_43 {dimension_numbers = #tpu.dot_dimension_numbers<[1], [0], [0], [1], [0, 0, 1, 1], [], []>} : vector<8x32xf32>, vector<32x128xf32>, vector<8x128xf32> -> vector<8x128xf32>
    %321 = arith.addf %320, %300 : vector<8x128xf32>
    %322 = vector.extract_strided_slice %321 {offsets = [0, 0], sizes = [8, 64], strides = [1, 1]} : vector<8x128xf32> to vector<8x64xf32>
    %323 = arith.negf %322 : vector<8x64xf32>
    %324 = math.exp %323 : vector<8x64xf32>
    %cst_44 = arith.constant 1.000000e+00 : f32
    %325 = vector.broadcast %cst_44 : f32 to vector<8x64xf32>
    %326 = arith.addf %325, %324 : vector<8x64xf32>
    %327 = arith.divf %325, %326 : vector<8x64xf32>
    %328 = vector.extract_strided_slice %321 {offsets = [0, 64], sizes = [8, 32], strides = [1, 1]} : vector<8x128xf32> to vector<8x32xf32>
    %329 = vector.extract_strided_slice %327 {offsets = [0, 0], sizes = [8, 32], strides = [1, 1]} : vector<8x64xf32> to vector<8x32xf32>
    %330 = vector.extract_strided_slice %321 {offsets = [0, 96], sizes = [8, 32], strides = [1, 1]} : vector<8x128xf32> to vector<8x32xf32>
    %331 = arith.mulf %329, %330 : vector<8x32xf32>
    %332 = arith.addf %328, %331 : vector<8x32xf32>
    %333 = math.tanh %332 : vector<8x32xf32>
    %334 = vector.extract_strided_slice %327 {offsets = [0, 32], sizes = [8, 32], strides = [1, 1]} : vector<8x64xf32> to vector<8x32xf32>
    %335 = arith.subf %297, %333 : vector<8x32xf32>
    %336 = arith.mulf %334, %335 : vector<8x32xf32>
    %337 = arith.addf %333, %336 : vector<8x32xf32>
    %cst_45 = arith.constant dense<0.000000e+00> : vector<8x128xf32>
    %338 = tpu.matmul %337, %5, %cst_45 {dimension_numbers = #tpu.dot_dimension_numbers<[1], [0], [0], [1], [0, 0, 1, 1], [], []>} : vector<8x32xf32>, vector<32x128xf32>, vector<8x128xf32> -> vector<8x128xf32>
    %cst_46 = arith.constant dense<0.000000e+00> : vector<8x128xf32>
    %339 = tpu.matmul %12, %6, %cst_46 {dimension_numbers = #tpu.dot_dimension_numbers<[1], [0], [0], [1], [0, 0, 1, 1], [], []>} : vector<8x8xf32>, vector<8x128xf32>, vector<8x128xf32> -> vector<8x128xf32>
    %340 = arith.addf %338, %339 : vector<8x128xf32>
    %341 = vector.broadcast %9 : vector<1x128xf32> to vector<8x128xf32>
    %342 = arith.addf %340, %341 : vector<8x128xf32>
    %c0_47 = arith.constant 0 : index
    %c0_48 = arith.constant 0 : index
    %343 = vector.load %arg2[%c0_47, %c0_48] : memref<8x128xf32, #tpu.memory_space<vmem>>, vector<8x128xf32>
    tpu.vector_store %arg2[%c0_47, %c0_48], %342 {strides = array<i32>} : memref<8x128xf32, #tpu.memory_space<vmem>>, vector<8x128xf32>,
    return
  }
}

</mosaic_0001>

<llo_original>
// kernel: tpu_custom_call.1
$region0: #{tpu_custom_call.1}
  #allocation0 [shape = 'u32[]', space=smem, size = 0x4, offset = 0x4, fixed_abs, tag = 'smem constant byte address 0x4 - core index']
  #allocation1 [shape = 'u32[72,128]{1,0:T(1,128)}', space=vmem, size = 0x9000, scoped, tag = 'internal scratch']
  %s0 = inlined_call_operand.vmem [shape: f32[72,8], index: 0, kind: input, shape index: {}]
  %s1 = inlined_call_operand.hbm [shape: f32[152,128], index: 1, kind: input, shape index: {}]
  %s2 = inlined_call_operand.hbm [shape: f32[8,128], index: 2, kind: output, shape index: {}]
  %s3 = sld [smem:[#allocation0]]
  $region22: #{tpu_custom_call.1} parent=0
    _
  %s5 = ssub.s32 1, %s3
  %s6 = scalar_select 0, %s5, %s3
  $region1: #{tpu_custom_call.1} parent=0
    #allocation2 [shape = 'u8[77824]{0}', space=vmem, size = 0x13000, scoped, tag = 'input window, operand 1, single buffered']
    #allocation3 [shape = 's32[1]{0}', space=sflag, size = 0x4, scoped, tag = 'scoped memory for tpu_custom_call.1']
    #allocation4 [shape = 's32[1]{0}', space=sflag, size = 0x4, scoped, tag = 'scoped memory for tpu_custom_call.1']
    #allocation5 [shape = 'u8[4096]{0}', space=vmem, size = 0x1000, scoped, tag = 'output window, operand 0, single buffered']
    %7 = vsyncpa [#allocation3], 0
    %8 = vsyncpa [#allocation4], 0
    // Predicated region
    $region2: #{tpu_custom_call.1} parent=1 // pred_check
      _
    $region3: #{tpu_custom_call.1} parent=1 // pred_check_branch
      %10 = sbr.rel (0) target = $region5
    $region4: #{tpu_custom_call.1} parent=1 // pred_region
      _
    $region5: #{tpu_custom_call.1} parent=1 // pred_fallthru
      _
    // Predicated region
    $region6: #{tpu_custom_call.1} parent=1 // pred_check
      _
    $region7: #{tpu_custom_call.1} parent=1 // pred_check_branch
      %12 = sbr.rel (0) target = $region9
    $region8: #{tpu_custom_call.1} parent=1 // pred_region
      %14 = vsyncadd [#allocation3], 0
      %s15 = sshll.u32 %s1, 4
      %s16 = int_to_ptr.hbm [resolvable:$true] %s15
      %s17 = sshll.u32 [#allocation2], 4
      %s18 = int_to_ptr.vmem [resolvable:$true] %s17
      %23 = dma.hbm_to_vmem [thread:$0]  %s16, 2432, %s18, [#allocation3], 128, 128, 8
    $region9: #{tpu_custom_call.1} parent=1 // pred_fallthru
      _
    // Predicated region
    $region10: #{tpu_custom_call.1} parent=1 // pred_check
      _
    $region11: #{tpu_custom_call.1} parent=1 // pred_check_branch
      %25 = sbr.rel (0) target = $region13
    $region12: #{tpu_custom_call.1} parent=1 // pred_region
      %27 = dma.done [#allocation3], 2432
    $region13: #{tpu_custom_call.1} parent=1 // pred_fallthru
      _
    %v28 = vld [vmem:[#allocation2] sm:$0xff]
    %v29 = vld [vmem:[#allocation2 + $0x8] sm:$0xff]
    %v30 = vld [vmem:[#allocation2 + $0x10] sm:$0xff]
    %v31 = vld [vmem:[#allocation2 + $0x18] sm:$0xff]
    %v32 = vld [vmem:[#allocation2 + $0x20] sm:$0xff]
    %v33 = vld [vmem:[#allocation2 + $0x28] sm:$0xff]
    %v34 = vld [vmem:[#allocation2 + $0x30] sm:$0xff]
    %v35 = vld [vmem:[#allocation2 + $0x38] sm:$0xff]
    %v36 = vld [vmem:[#allocation2 + $0x40] sm:$0xff]
    %v37 = vld [vmem:[#allocation2 + $0x48] sm:$0xff]
    %v38 = vld [vmem:[#allocation2 + $0x50] sm:$0xff]
    %v39 = vld [vmem:[#allocation2 + $0x58] sm:$0xff]
    %v40 = vld [vmem:[#allocation2 + $0x60] sm:$0xff]
    %v41 = vld [vmem:[#allocation2 + $0x68] sm:$0xff]
    %v42 = vld [vmem:[#allocation2 + $0x70] sm:$0xff]
    %v43 = vld [vmem:[#allocation2 + $0x78] sm:$0xff]
    %v44 = vld [vmem:[#allocation2 + $0x80] sm:$0xff]
    %v45 = vld [vmem:[#allocation2 + $0x88] sm:$0xff]
    %v46 = vld [vmem:[#allocation2 + $0x90] sm:$0xff]
    %v47 = vld [vmem:[%s0] sm:$0xff]
    %v48 = vld [vmem:[%s0 + $0x8] sm:$0xff]
    %v49 = vld [vmem:[%s0 + $0x10] sm:$0xff]
    %v50 = vld [vmem:[%s0 + $0x18] sm:$0xff]
    %v51 = vld [vmem:[%s0 + $0x20] sm:$0xff]
    %v52 = vld [vmem:[%s0 + $0x28] sm:$0xff]
    %v53 = vld [vmem:[%s0 + $0x30] sm:$0xff]
    %v54 = vld [vmem:[%s0 + $0x38] sm:$0xff]
    %v55 = vld [vmem:[%s0 + $0x40] sm:$0xff]
    %v56 = vperm.slane %v46, 0
    %vm57 = vcmask 64512
    %v59 = vsel %vm57, %v47, 0
    %v62 = vsel %vm57, %v48, 0
    %v65 = vsel %vm57, %v49, 0
    %v68 = vsel %vm57, %v50, 0
    %v71 = vsel %vm57, %v51, 0
    %v74 = vsel %vm57, %v52, 0
    %v77 = vsel %vm57, %v53, 0
    %v80 = vsel %vm57, %v54, 0
    %82 = vmatpush.msra.mxu0 0.0
    %83 = vmatpush.msra.mxu0 0.0
    %84 = vmatpush.msra.mxu0 0.0
    %85 = vmatpush.msra.mxu0 0.0
    %86 = vmatpush.msra.mxu0 0.0
    %87 = vmatpush.msra.mxu0 0.0
    %88 = vmatpush.msra.mxu0 0.0
    %89 = vmatpush.msra.mxu0 0.0
    %90 = vmatpush.msra.mxu0 0.0
    %91 = vmatpush.msra.mxu0 0.0
    %92 = vmatpush.msra.mxu0 0.0
    %93 = vmatpush.msra.mxu0 0.0
    %94 = vmatpush.msra.mxu0 0.0
    %95 = vmatpush.msra.mxu0 0.0
    %96 = vmatpush.msra.mxu0 0.0
    %97 = vmatpush.msra.mxu0 %v28
    %98 = vmatmul.f32.gmra.mxu0 %v59
    %v99 = vpop.f32.mrf.mxu0
    %v100 = vadd.f32 %v56, %v99
    %101 = vmatmul.f32.gmra.mxu0 %v62
    %v102 = vpop.f32.mrf.mxu0
    %v103 = vadd.f32 %v56, %v102
    %104 = vmatmul.f32.gmra.mxu0 %v65
    %v105 = vpop.f32.mrf.mxu0
    %v106 = vadd.f32 %v56, %v105
    %107 = vmatmul.f32.gmra.mxu0 %v68
    %v108 = vpop.f32.mrf.mxu0
    %v109 = vadd.f32 %v56, %v108
    %110 = vmatmul.f32.gmra.mxu0 %v71
    %v111 = vpop.f32.mrf.mxu0
    %v112 = vadd.f32 %v56, %v111
    %113 = vmatmul.f32.gmra.mxu0 %v74
    %v114 = vpop.f32.mrf.mxu0
    %v115 = vadd.f32 %v56, %v114
    %116 = vmatmul.f32.gmra.mxu0 %v77
    %v117 = vpop.f32.mrf.mxu0
    %v118 = vadd.f32 %v56, %v117
    %119 = vmatmul.f32.gmra.mxu0 %v80
    %v120 = vpop.f32.mrf.mxu0
    %v121 = vadd.f32 %v56, %v120
    %122 = vdwg.mxu0
    %v123 = vperm.slane %v46, 1
    %vm124 = vcmask 261120
    %v126 = vsel %vm124, 0.0, 0
    %128 = vmatpush.msra.mxu0 0.0
    %129 = vmatpush.msra.mxu0 0.0
    %130 = vmatpush.msra.mxu0 0.0
    %131 = vmatpush.msra.mxu0 0.0
    %132 = vmatpush.msra.mxu0 0.0
    %133 = vmatpush.msra.mxu0 0.0
    %134 = vmatpush.msra.mxu0 0.0
    %135 = vmatpush.msra.mxu0 0.0
    %136 = vmatpush.msra.mxu0 0.0
    %137 = vmatpush.msra.mxu0 0.0
    %138 = vmatpush.msra.mxu0 0.0
    %139 = vmatpush.msra.mxu0 0.0
    %140 = vmatpush.msra.mxu0 %v40
    %141 = vmatpush.msra.mxu0 %v39
    %142 = vmatpush.msra.mxu0 %v38
    %143 = vmatpush.msra.mxu0 %v37
    %144 = vmatmul.f32.gmra.mxu0 %v126
    %v145 = vpop.f32.mrf.mxu0
    %v146 = vadd.f32 %v123, %v145
    %147 = vdwg.mxu0
    %148 = vmatpush.msra.mxu0 0.0
    %149 = vmatpush.msra.mxu0 0.0
    %150 = vmatpush.msra.mxu0 0.0
    %151 = vmatpush.msra.mxu0 0.0
    %152 = vmatpush.msra.mxu0 0.0
    %153 = vmatpush.msra.mxu0 0.0
    %154 = vmatpush.msra.mxu0 0.0
    %155 = vmatpush.msra.mxu0 0.0
    %156 = vmatpush.msra.mxu0 0.0
    %157 = vmatpush.msra.mxu0 0.0
    %158 = vmatpush.msra.mxu0 0.0
    %159 = vmatpush.msra.mxu0 0.0
    %160 = vmatpush.msra.mxu0 %v32
    %161 = vmatpush.msra.mxu0 %v31
    %162 = vmatpush.msra.mxu0 %v30
    %163 = vmatpush.msra.mxu0 %v29
    %164 = vmatmul.f32.gmra.mxu0 %v126
    %v165 = vpop.f32.mrf.mxu0
    %v166 = vadd.f32 0.0, %v165
    %167 = vdwg.mxu0
    %v168 = vadd.f32 %v100, %v166
    %v169 = vxor.u32 %v168, 2147483648
    %v170 = vmul.f32 %v169, 1.442695
    %v171 = vpow.pop %v170
    %v172 = vadd.f32 %v171, 1.0
    %v173 = vrcp.pop %v172
    %v174 = vmul.f32 %v172, %v173
    %v175 = vsub.f32 1.0, %v174
    %v176 = vmul.f32 %v173, %v175
    %v177 = vadd.f32 %v173, %v176
    %vm178 = vweird.f32 %v172
    %vm179 = vweird.f32 %v173
    %vm180 = vmor %vm178, %vm179
    %v181 = vsel %vm180, %v173, %v177
    %v182 = vand.u32 2147483647, %v172
    %vm183 = vcmp.eq.f32.partialorder %v182, 8.507059e+37
    %v184 = vand.u32 %v172, 2147483648
    %v185 = vor.u32 1.1754944e-38, %v184
    %v186 = vsel %vm183, %v185, %v181
    %v187 = vmul.f32 1.0, %v186
    %189 = vrot.lane.b32.xlu0 %v168, 32
    %v190 = vpop.permute.xlu0 %189
    %v192 = vmul.f32 %v187, %v190
    %194 = vrot.lane.b32.xlu0 %v192, 64
    %v195 = vpop.permute.xlu0 %194
    %v197 = vadd.f32 %v168, %v195
    %v198 = vtanh.pop %v197
    %v199 = vsub.f32 0.0, %v198
    %201 = vrot.lane.b32.xlu0 %v199, 96
    %v202 = vpop.permute.xlu0 %201
    %v204 = vmul.f32 %v187, %v202
    %206 = vrot.lane.b32.xlu0 %v204, 32
    %v207 = vpop.permute.xlu0 %206
    %v209 = vadd.f32 %v198, %v207
    %211 = vrot.lane.b32.xlu0 %v209, 64
    %v212 = vpop.permute.xlu0 %211
    %v213 = vsel %vm124, %v212, 0
    %215 = vmatpush.msra.mxu0 0.0
    %216 = vmatpush.msra.mxu0 0.0
    %217 = vmatpush.msra.mxu0 0.0
    %218 = vmatpush.msra.mxu0 0.0
    %219 = vmatpush.msra.mxu0 0.0
    %220 = vmatpush.msra.mxu0 0.0
    %221 = vmatpush.msra.mxu0 0.0
    %222 = vmatpush.msra.mxu0 0.0
    %223 = vmatpush.msra.mxu0 0.0
    %224 = vmatpush.msra.mxu0 0.0
    %225 = vmatpush.msra.mxu0 0.0
    %226 = vmatpush.msra.mxu0 0.0
    %227 = vmatpush.msra.mxu0 %v36
    %228 = vmatpush.msra.mxu0 %v35
    %229 = vmatpush.msra.mxu0 %v34
    %230 = vmatpush.msra.mxu0 %v33
    %231 = vmatmul.f32.gmra.mxu0 %v213
    %v232 = vpop.f32.mrf.mxu0
    %v233 = vadd.f32 %v146, %v232
    %234 = vdwg.mxu0
    %v235 = vxor.u32 %v233, 2147483648
    %v236 = vmul.f32 %v235, 1.442695
    %v237 = vpow.pop %v236
    %v238 = vadd.f32 %v237, 1.0
    %v239 = vrcp.pop %v238
    %v240 = vmul.f32 %v238, %v239
    %v241 = vsub.f32 1.0, %v240
    %v242 = vmul.f32 %v239, %v241
    %v243 = vadd.f32 %v239, %v242
    %vm244 = vweird.f32 %v238
    %vm245 = vweird.f32 %v239
    %vm246 = vmor %vm244, %vm245
    %v247 = vsel %vm246, %v239, %v243
    %v248 = vand.u32 2147483647, %v238
    %vm249 = vcmp.eq.f32.partialorder %v248, 8.507059e+37
    %v250 = vand.u32 %v238, 2147483648
    %v251 = vor.u32 1.1754944e-38, %v250
    %v252 = vsel %vm249, %v251, %v247
    %v253 = vmul.f32 1.0, %v252
    %255 = vrot.lane.b32.xlu0 %v233, 32
    %v256 = vpop.permute.xlu0 %255
    %v258 = vmul.f32 %v253, %v256
    %260 = vrot.lane.b32.xlu0 %v258, 64
    %v261 = vpop.permute.xlu0 %260
    %v263 = vadd.f32 %v233, %v261
    %v264 = vtanh.pop %v263
    %v265 = vsub.f32 0.0, %v264
    %267 = vrot.lane.b32.xlu0 %v265, 96
    %v268 = vpop.permute.xlu0 %267
    %v270 = vmul.f32 %v253, %v268
    %272 = vrot.lane.b32.xlu0 %v270, 32
    %v273 = vpop.permute.xlu0 %272
    %v275 = vadd.f32 %v264, %v273
    %277 = vrot.lane.b32.xlu0 %v275, 64
    %v278 = vpop.permute.xlu0 %277
    %v279 = vsel %vm124, %v278, 0
    %281 = vmatpush.msra.mxu0 0.0
    %282 = vmatpush.msra.mxu0 0.0
    %283 = vmatpush.msra.mxu0 0.0
    %284 = vmatpush.msra.mxu0 0.0
    %285 = vmatpush.msra.mxu0 0.0
    %286 = vmatpush.msra.mxu0 0.0
    %287 = vmatpush.msra.mxu0 0.0
    %288 = vmatpush.msra.mxu0 0.0
    %289 = vmatpush.msra.mxu0 0.0
    %290 = vmatpush.msra.mxu0 0.0
    %291 = vmatpush.msra.mxu0 0.0
    %292 = vmatpush.msra.mxu0 0.0
    %293 = vmatpush.msra.mxu0 %v40
    %294 = vmatpush.msra.mxu0 %v39
    %295 = vmatpush.msra.mxu0 %v38
    %296 = vmatpush.msra.mxu0 %v37
    %297 = vmatmul.f32.gmra.mxu0 %v279
    %v298 = vpop.f32.mrf.mxu0
    %v299 = vadd.f32 %v123, %v298
    %300 = vdwg.mxu0
    %301 = vmatpush.msra.mxu0 0.0
    %302 = vmatpush.msra.mxu0 0.0
    %303 = vmatpush.msra.mxu0 0.0
    %304 = vmatpush.msra.mxu0 0.0
    %305 = vmatpush.msra.mxu0 0.0
    %306 = vmatpush.msra.mxu0 0.0
    %307 = vmatpush.msra.mxu0 0.0
    %308 = vmatpush.msra.mxu0 0.0
    %309 = vmatpush.msra.mxu0 0.0
    %310 = vmatpush.msra.mxu0 0.0
    %311 = vmatpush.msra.mxu0 0.0
    %312 = vmatpush.msra.mxu0 0.0
    %313 = vmatpush.msra.mxu0 %v32
    %314 = vmatpush.msra.mxu0 %v31
    %315 = vmatpush.msra.mxu0 %v30
    %316 = vmatpush.msra.mxu0 %v29
    %317 = vmatmul.f32.gmra.mxu0 %v213
    %v318 = vpop.f32.mrf.mxu0
    %v319 = vadd.f32 0.0, %v318
    %320 = vdwg.mxu0
    %v321 = vadd.f32 %v103, %v319
    %v322 = vxor.u32 %v321, 2147483648
    %v323 = vmul.f32 %v322, 1.442695
    %v324 = vpow.pop %v323
    %v325 = vadd.f32 %v324, 1.0
    %v326 = vrcp.pop %v325
    %v327 = vmul.f32 %v325, %v326
    %v328 = vsub.f32 1.0, %v327
    %v329 = vmul.f32 %v326, %v328
    %v330 = vadd.f32 %v326, %v329
    %vm331 = vweird.f32 %v325
    %vm332 = vweird.f32 %v326
    %vm333 = vmor %vm331, %vm332
    %v334 = vsel %vm333, %v326, %v330
    %v335 = vand.u32 2147483647, %v325
    %vm336 = vcmp.eq.f32.partialorder %v335, 8.507059e+37
    %v337 = vand.u32 %v325, 2147483648
    %v338 = vor.u32 1.1754944e-38, %v337
    %v339 = vsel %vm336, %v338, %v334
    %v340 = vmul.f32 1.0, %v339
    %342 = vrot.lane.b32.xlu0 %v321, 32
    %v343 = vpop.permute.xlu0 %342
    %v345 = vmul.f32 %v340, %v343
    %347 = vrot.lane.b32.xlu0 %v345, 64
    %v348 = vpop.permute.xlu0 %347
    %v350 = vadd.f32 %v321, %v348
    %v351 = vtanh.pop %v350
    %v352 = vsub.f32 %v209, %v351
    %354 = vrot.lane.b32.xlu0 %v352, 96
    %v355 = vpop.permute.xlu0 %354
    %v357 = vmul.f32 %v340, %v355
    %359 = vrot.lane.b32.xlu0 %v357, 32
    %v360 = vpop.permute.xlu0 %359
    %v362 = vadd.f32 %v351, %v360
    %364 = vrot.lane.b32.xlu0 %v362, 64
    %v365 = vpop.permute.xlu0 %364
    %v366 = vsel %vm124, %v365, 0
    %368 = vmatpush.msra.mxu0 0.0
    %369 = vmatpush.msra.mxu0 0.0
    %370 = vmatpush.msra.mxu0 0.0
    %371 = vmatpush.msra.mxu0 0.0
    %372 = vmatpush.msra.mxu0 0.0
    %373 = vmatpush.msra.mxu0 0.0
    %374 = vmatpush.msra.mxu0 0.0
    %375 = vmatpush.msra.mxu0 0.0
    %376 = vmatpush.msra.mxu0 0.0
    %377 = vmatpush.msra.mxu0 0.0
    %378 = vmatpush.msra.mxu0 0.0
    %379 = vmatpush.msra.mxu0 0.0
    %380 = vmatpush.msra.mxu0 %v36
    %381 = vmatpush.msra.mxu0 %v35
    %382 = vmatpush.msra.mxu0 %v34
    %383 = vmatpush.msra.mxu0 %v33
    %384 = vmatmul.f32.gmra.mxu0 %v366
    %v385 = vpop.f32.mrf.mxu0
    %v386 = vadd.f32 %v299, %v385
    %387 = vdwg.mxu0
    %v388 = vxor.u32 %v386, 2147483648
    %v389 = vmul.f32 %v388, 1.442695
    %v390 = vpow.pop %v389
    %v391 = vadd.f32 %v390, 1.0
    %v392 = vrcp.pop %v391
    %v393 = vmul.f32 %v391, %v392
    %v394 = vsub.f32 1.0, %v393
    %v395 = vmul.f32 %v392, %v394
    %v396 = vadd.f32 %v392, %v395
    %vm397 = vweird.f32 %v391
    %vm398 = vweird.f32 %v392
    %vm399 = vmor %vm397, %vm398
    %v400 = vsel %vm399, %v392, %v396
    %v401 = vand.u32 2147483647, %v391
    %vm402 = vcmp.eq.f32.partialorder %v401, 8.507059e+37
    %v403 = vand.u32 %v391, 2147483648
    %v404 = vor.u32 1.1754944e-38, %v403
    %v405 = vsel %vm402, %v404, %v400
    %v406 = vmul.f32 1.0, %v405
    %408 = vrot.lane.b32.xlu0 %v386, 32
    %v409 = vpop.permute.xlu0 %408
    %v411 = vmul.f32 %v406, %v409
    %413 = vrot.lane.b32.xlu0 %v411, 64
    %v414 = vpop.permute.xlu0 %413
    %v416 = vadd.f32 %v386, %v414
    %v417 = vtanh.pop %v416
    %v418 = vsub.f32 %v275, %v417
    %420 = vrot.lane.b32.xlu0 %v418, 96
    %v421 = vpop.permute.xlu0 %420
    %v423 = vmul.f32 %v406, %v421
    %425 = vrot.lane.b32.xlu0 %v423, 32
    %v426 = vpop.permute.xlu0 %425
    %v428 = vadd.f32 %v417, %v426
    %430 = vrot.lane.b32.xlu0 %v428, 64
    %v431 = vpop.permute.xlu0 %430
    %v432 = vsel %vm124, %v431, 0
    %434 = vmatpush.msra.mxu0 0.0
    %435 = vmatpush.msra.mxu0 0.0
    %436 = vmatpush.msra.mxu0 0.0
    %437 = vmatpush.msra.mxu0 0.0
    %438 = vmatpush.msra.mxu0 0.0
    %439 = vmatpush.msra.mxu0 0.0
    %440 = vmatpush.msra.mxu0 0.0
    %441 = vmatpush.msra.mxu0 0.0
    %442 = vmatpush.msra.mxu0 0.0
    %443 = vmatpush.msra.mxu0 0.0
    %444 = vmatpush.msra.mxu0 0.0
    %445 = vmatpush.msra.mxu0 0.0
    %446 = vmatpush.msra.mxu0 %v40
    %447 = vmatpush.msra.mxu0 %v39
    %448 = vmatpush.msra.mxu0 %v38
    %449 = vmatpush.msra.mxu0 %v37
    %450 = vmatmul.f32.gmra.mxu0 %v432
    %v451 = vpop.f32.mrf.mxu0
    %v452 = vadd.f32 %v123, %v451
    %453 = vdwg.mxu0
    %454 = vmatpush.msra.mxu0 0.0
    %455 = vmatpush.msra.mxu0 0.0
    %456 = vmatpush.msra.mxu0 0.0
    %457 = vmatpush.msra.mxu0 0.0
    %458 = vmatpush.msra.mxu0 0.0
    %459 = vmatpush.msra.mxu0 0.0
    %460 = vmatpush.msra.mxu0 0.0
    %461 = vmatpush.msra.mxu0 0.0
    %462 = vmatpush.msra.mxu0 0.0
    %463 = vmatpush.msra.mxu0 0.0
    %464 = vmatpush.msra.mxu0 0.0
    %465 = vmatpush.msra.mxu0 0.0
    %466 = vmatpush.msra.mxu0 %v32
    %467 = vmatpush.msra.mxu0 %v31
    %468 = vmatpush.msra.mxu0 %v30
    %469 = vmatpush.msra.mxu0 %v29
    %470 = vmatmul.f32.gmra.mxu0 %v366
    %v471 = vpop.f32.mrf.mxu0
    %v472 = vadd.f32 0.0, %v471
    %473 = vdwg.mxu0
    %v474 = vadd.f32 %v106, %v472
    %v475 = vxor.u32 %v474, 2147483648
    %v476 = vmul.f32 %v475, 1.442695
    %v477 = vpow.pop %v476
    %v478 = vadd.f32 %v477, 1.0
    %v479 = vrcp.pop %v478
    %v480 = vmul.f32 %v478, %v479
    %v481 = vsub.f32 1.0, %v480
    %v482 = vmul.f32 %v479, %v481
    %v483 = vadd.f32 %v479, %v482
    %vm484 = vweird.f32 %v478
    %vm485 = vweird.f32 %v479
    %vm486 = vmor %vm484, %vm485
    %v487 = vsel %vm486, %v479, %v483
    %v488 = vand.u32 2147483647, %v478
    %vm489 = vcmp.eq.f32.partialorder %v488, 8.507059e+37
    %v490 = vand.u32 %v478, 2147483648
    %v491 = vor.u32 1.1754944e-38, %v490
    %v492 = vsel %vm489, %v491, %v487
    %v493 = vmul.f32 1.0, %v492
    %495 = vrot.lane.b32.xlu0 %v474, 32
    %v496 = vpop.permute.xlu0 %495
    %v498 = vmul.f32 %v493, %v496
    %500 = vrot.lane.b32.xlu0 %v498, 64
    %v501 = vpop.permute.xlu0 %500
    %v503 = vadd.f32 %v474, %v501
    %v504 = vtanh.pop %v503
    %v505 = vsub.f32 %v362, %v504
    %507 = vrot.lane.b32.xlu0 %v505, 96
    %v508 = vpop.permute.xlu0 %507
    %v510 = vmul.f32 %v493, %v508
    %512 = vrot.lane.b32.xlu0 %v510, 32
    %v513 = vpop.permute.xlu0 %512
    %v515 = vadd.f32 %v504, %v513
    %517 = vrot.lane.b32.xlu0 %v515, 64
    %v518 = vpop.permute.xlu0 %517
    %v519 = vsel %vm124, %v518, 0
    %521 = vmatpush.msra.mxu0 0.0
    %522 = vmatpush.msra.mxu0 0.0
    %523 = vmatpush.msra.mxu0 0.0
    %524 = vmatpush.msra.mxu0 0.0
    %525 = vmatpush.msra.mxu0 0.0
    %526 = vmatpush.msra.mxu0 0.0
    %527 = vmatpush.msra.mxu0 0.0
    %528 = vmatpush.msra.mxu0 0.0
    %529 = vmatpush.msra.mxu0 0.0
    %530 = vmatpush.msra.mxu0 0.0
    %531 = vmatpush.msra.mxu0 0.0
    %532 = vmatpush.msra.mxu0 0.0
    %533 = vmatpush.msra.mxu0 %v36
    %534 = vmatpush.msra.mxu0 %v35
    %535 = vmatpush.msra.mxu0 %v34
    %536 = vmatpush.msra.mxu0 %v33
    %537 = vmatmul.f32.gmra.mxu0 %v519
    %v538 = vpop.f32.mrf.mxu0
    %v539 = vadd.f32 %v452, %v538
    %540 = vdwg.mxu0
    %v541 = vxor.u32 %v539, 2147483648
    %v542 = vmul.f32 %v541, 1.442695
    %v543 = vpow.pop %v542
    %v544 = vadd.f32 %v543, 1.0
    %v545 = vrcp.pop %v544
    %v546 = vmul.f32 %v544, %v545
    %v547 = vsub.f32 1.0, %v546
    %v548 = vmul.f32 %v545, %v547
    %v549 = vadd.f32 %v545, %v548
    %vm550 = vweird.f32 %v544
    %vm551 = vweird.f32 %v545
    %vm552 = vmor %vm550, %vm551
    %v553 = vsel %vm552, %v545, %v549
    %v554 = vand.u32 2147483647, %v544
    %vm555 = vcmp.eq.f32.partialorder %v554, 8.507059e+37
    %v556 = vand.u32 %v544, 2147483648
    %v557 = vor.u32 1.1754944e-38, %v556
    %v558 = vsel %vm555, %v557, %v553
    %v559 = vmul.f32 1.0, %v558
    %561 = vrot.lane.b32.xlu0 %v539, 32
    %v562 = vpop.permute.xlu0 %561
    %v564 = vmul.f32 %v559, %v562
    %566 = vrot.lane.b32.xlu0 %v564, 64
    %v567 = vpop.permute.xlu0 %566
    %v569 = vadd.f32 %v539, %v567
    %v570 = vtanh.pop %v569
    %v571 = vsub.f32 %v428, %v570
    %573 = vrot.lane.b32.xlu0 %v571, 96
    %v574 = vpop.permute.xlu0 %573
    %v576 = vmul.f32 %v559, %v574
    %578 = vrot.lane.b32.xlu0 %v576, 32
    %v579 = vpop.permute.xlu0 %578
    %v581 = vadd.f32 %v570, %v579
    %583 = vrot.lane.b32.xlu0 %v581, 64
    %v584 = vpop.permute.xlu0 %583
    %v585 = vsel %vm124, %v584, 0
    %587 = vmatpush.msra.mxu0 0.0
    %588 = vmatpush.msra.mxu0 0.0
    %589 = vmatpush.msra.mxu0 0.0
    %590 = vmatpush.msra.mxu0 0.0
    %591 = vmatpush.msra.mxu0 0.0
    %592 = vmatpush.msra.mxu0 0.0
    %593 = vmatpush.msra.mxu0 0.0
    %594 = vmatpush.msra.mxu0 0.0
    %595 = vmatpush.msra.mxu0 0.0
    %596 = vmatpush.msra.mxu0 0.0
    %597 = vmatpush.msra.mxu0 0.0
    %598 = vmatpush.msra.mxu0 0.0
    %599 = vmatpush.msra.mxu0 %v40
    %600 = vmatpush.msra.mxu0 %v39
    %601 = vmatpush.msra.mxu0 %v38
    %602 = vmatpush.msra.mxu0 %v37
    %603 = vmatmul.f32.gmra.mxu0 %v585
    %v604 = vpop.f32.mrf.mxu0
    %v605 = vadd.f32 %v123, %v604
    %606 = vdwg.mxu0
    %607 = vmatpush.msra.mxu0 0.0
    %608 = vmatpush.msra.mxu0 0.0
    %609 = vmatpush.msra.mxu0 0.0
    %610 = vmatpush.msra.mxu0 0.0
    %611 = vmatpush.msra.mxu0 0.0
    %612 = vmatpush.msra.mxu0 0.0
    %613 = vmatpush.msra.mxu0 0.0
    %614 = vmatpush.msra.mxu0 0.0
    %615 = vmatpush.msra.mxu0 0.0
    %616 = vmatpush.msra.mxu0 0.0
    %617 = vmatpush.msra.mxu0 0.0
    %618 = vmatpush.msra.mxu0 0.0
    %619 = vmatpush.msra.mxu0 %v32
    %620 = vmatpush.msra.mxu0 %v31
    %621 = vmatpush.msra.mxu0 %v30
    %622 = vmatpush.msra.mxu0 %v29
    %623 = vmatmul.f32.gmra.mxu0 %v519
    %v624 = vpop.f32.mrf.mxu0
    %v625 = vadd.f32 0.0, %v624
    %626 = vdwg.mxu0
    %v627 = vadd.f32 %v109, %v625
    %v628 = vxor.u32 %v627, 2147483648
    %v629 = vmul.f32 %v628, 1.442695
    %v630 = vpow.pop %v629
    %v631 = vadd.f32 %v630, 1.0
    %v632 = vrcp.pop %v631
    %v633 = vmul.f32 %v631, %v632
    %v634 = vsub.f32 1.0, %v633
    %v635 = vmul.f32 %v632, %v634
    %v636 = vadd.f32 %v632, %v635
    %vm637 = vweird.f32 %v631
    %vm638 = vweird.f32 %v632
    %vm639 = vmor %vm637, %vm638
    %v640 = vsel %vm639, %v632, %v636
    %v641 = vand.u32 2147483647, %v631
    %vm642 = vcmp.eq.f32.partialorder %v641, 8.507059e+37
    %v643 = vand.u32 %v631, 2147483648
    %v644 = vor.u32 1.1754944e-38, %v643
    %v645 = vsel %vm642, %v644, %v640
    %v646 = vmul.f32 1.0, %v645
    %648 = vrot.lane.b32.xlu0 %v627, 32
    %v649 = vpop.permute.xlu0 %648
    %v651 = vmul.f32 %v646, %v649
    %653 = vrot.lane.b32.xlu0 %v651, 64
    %v654 = vpop.permute.xlu0 %653
    %v656 = vadd.f32 %v627, %v654
    %v657 = vtanh.pop %v656
    %v658 = vsub.f32 %v515, %v657
    %660 = vrot.lane.b32.xlu0 %v658, 96
    %v661 = vpop.permute.xlu0 %660
    %v663 = vmul.f32 %v646, %v661
    %665 = vrot.lane.b32.xlu0 %v663, 32
    %v666 = vpop.permute.xlu0 %665
    %v668 = vadd.f32 %v657, %v666
    %670 = vrot.lane.b32.xlu0 %v668, 64
    %v671 = vpop.permute.xlu0 %670
    %v672 = vsel %vm124, %v671, 0
    %674 = vmatpush.msra.mxu0 0.0
    %675 = vmatpush.msra.mxu0 0.0
    %676 = vmatpush.msra.mxu0 0.0
    %677 = vmatpush.msra.mxu0 0.0
    %678 = vmatpush.msra.mxu0 0.0
    %679 = vmatpush.msra.mxu0 0.0
    %680 = vmatpush.msra.mxu0 0.0
    %681 = vmatpush.msra.mxu0 0.0
    %682 = vmatpush.msra.mxu0 0.0
    %683 = vmatpush.msra.mxu0 0.0
    %684 = vmatpush.msra.mxu0 0.0
    %685 = vmatpush.msra.mxu0 0.0
    %686 = vmatpush.msra.mxu0 %v36
    %687 = vmatpush.msra.mxu0 %v35
    %688 = vmatpush.msra.mxu0 %v34
    %689 = vmatpush.msra.mxu0 %v33
    %690 = vmatmul.f32.gmra.mxu0 %v672
    %v691 = vpop.f32.mrf.mxu0
    %v692 = vadd.f32 %v605, %v691
    %693 = vdwg.mxu0
    %v694 = vxor.u32 %v692, 2147483648
    %v695 = vmul.f32 %v694, 1.442695
    %v696 = vpow.pop %v695
    %v697 = vadd.f32 %v696, 1.0
    %v698 = vrcp.pop %v697
    %v699 = vmul.f32 %v697, %v698
    %v700 = vsub.f32 1.0, %v699
    %v701 = vmul.f32 %v698, %v700
    %v702 = vadd.f32 %v698, %v701
    %vm703 = vweird.f32 %v697
    %vm704 = vweird.f32 %v698
    %vm705 = vmor %vm703, %vm704
    %v706 = vsel %vm705, %v698, %v702
    %v707 = vand.u32 2147483647, %v697
    %vm708 = vcmp.eq.f32.partialorder %v707, 8.507059e+37
    %v709 = vand.u32 %v697, 2147483648
    %v710 = vor.u32 1.1754944e-38, %v709
    %v711 = vsel %vm708, %v710, %v706
    %v712 = vmul.f32 1.0, %v711
    %714 = vrot.lane.b32.xlu0 %v692, 32
    %v715 = vpop.permute.xlu0 %714
    %v717 = vmul.f32 %v712, %v715
    %719 = vrot.lane.b32.xlu0 %v717, 64
    %v720 = vpop.permute.xlu0 %719
    %v722 = vadd.f32 %v692, %v720
    %v723 = vtanh.pop %v722
    %v724 = vsub.f32 %v581, %v723
    %726 = vrot.lane.b32.xlu0 %v724, 96
    %v727 = vpop.permute.xlu0 %726
    %v729 = vmul.f32 %v712, %v727
    %731 = vrot.lane.b32.xlu0 %v729, 32
    %v732 = vpop.permute.xlu0 %731
    %v734 = vadd.f32 %v723, %v732
    %736 = vrot.lane.b32.xlu0 %v734, 64
    %v737 = vpop.permute.xlu0 %736
    %v738 = vsel %vm124, %v737, 0
    %740 = vmatpush.msra.mxu0 0.0
    %741 = vmatpush.msra.mxu0 0.0
    %742 = vmatpush.msra.mxu0 0.0
    %743 = vmatpush.msra.mxu0 0.0
    %744 = vmatpush.msra.mxu0 0.0
    %745 = vmatpush.msra.mxu0 0.0
    %746 = vmatpush.msra.mxu0 0.0
    %747 = vmatpush.msra.mxu0 0.0
    %748 = vmatpush.msra.mxu0 0.0
    %749 = vmatpush.msra.mxu0 0.0
    %750 = vmatpush.msra.mxu0 0.0
    %751 = vmatpush.msra.mxu0 0.0
    %752 = vmatpush.msra.mxu0 %v40
    %753 = vmatpush.msra.mxu0 %v39
    %754 = vmatpush.msra.mxu0 %v38
    %755 = vmatpush.msra.mxu0 %v37
    %756 = vmatmul.f32.gmra.mxu0 %v738
    %v757 = vpop.f32.mrf.mxu0
    %v758 = vadd.f32 %v123, %v757
    %759 = vdwg.mxu0
    %760 = vmatpush.msra.mxu0 0.0
    %761 = vmatpush.msra.mxu0 0.0
    %762 = vmatpush.msra.mxu0 0.0
    %763 = vmatpush.msra.mxu0 0.0
    %764 = vmatpush.msra.mxu0 0.0
    %765 = vmatpush.msra.mxu0 0.0
    %766 = vmatpush.msra.mxu0 0.0
    %767 = vmatpush.msra.mxu0 0.0
    %768 = vmatpush.msra.mxu0 0.0
    %769 = vmatpush.msra.mxu0 0.0
    %770 = vmatpush.msra.mxu0 0.0
    %771 = vmatpush.msra.mxu0 0.0
    %772 = vmatpush.msra.mxu0 %v32
    %773 = vmatpush.msra.mxu0 %v31
    %774 = vmatpush.msra.mxu0 %v30
    %775 = vmatpush.msra.mxu0 %v29
    %776 = vmatmul.f32.gmra.mxu0 %v672
    %v777 = vpop.f32.mrf.mxu0
    %v778 = vadd.f32 0.0, %v777
    %779 = vdwg.mxu0
    %v780 = vadd.f32 %v112, %v778
    %v781 = vxor.u32 %v780, 2147483648
    %v782 = vmul.f32 %v781, 1.442695
    %v783 = vpow.pop %v782
    %v784 = vadd.f32 %v783, 1.0
    %v785 = vrcp.pop %v784
    %v786 = vmul.f32 %v784, %v785
    %v787 = vsub.f32 1.0, %v786
    %v788 = vmul.f32 %v785, %v787
    %v789 = vadd.f32 %v785, %v788
    %vm790 = vweird.f32 %v784
    %vm791 = vweird.f32 %v785
    %vm792 = vmor %vm790, %vm791
    %v793 = vsel %vm792, %v785, %v789
    %v794 = vand.u32 2147483647, %v784
    %vm795 = vcmp.eq.f32.partialorder %v794, 8.507059e+37
    %v796 = vand.u32 %v784, 2147483648
    %v797 = vor.u32 1.1754944e-38, %v796
    %v798 = vsel %vm795, %v797, %v793
    %v799 = vmul.f32 1.0, %v798
    %801 = vrot.lane.b32.xlu0 %v780, 32
    %v802 = vpop.permute.xlu0 %801
    %v804 = vmul.f32 %v799, %v802
    %806 = vrot.lane.b32.xlu0 %v804, 64
    %v807 = vpop.permute.xlu0 %806
    %v809 = vadd.f32 %v780, %v807
    %v810 = vtanh.pop %v809
    %v811 = vsub.f32 %v668, %v810
    %813 = vrot.lane.b32.xlu0 %v811, 96
    %v814 = vpop.permute.xlu0 %813
    %v816 = vmul.f32 %v799, %v814
    %818 = vrot.lane.b32.xlu0 %v816, 32
    %v819 = vpop.permute.xlu0 %818
    %v821 = vadd.f32 %v810, %v819
    %823 = vrot.lane.b32.xlu0 %v821, 64
    %v824 = vpop.permute.xlu0 %823
    %v825 = vsel %vm124, %v824, 0
    %827 = vmatpush.msra.mxu0 0.0
    %828 = vmatpush.msra.mxu0 0.0
    %829 = vmatpush.msra.mxu0 0.0
    %830 = vmatpush.msra.mxu0 0.0
    %831 = vmatpush.msra.mxu0 0.0
    %832 = vmatpush.msra.mxu0 0.0
    %833 = vmatpush.msra.mxu0 0.0
    %834 = vmatpush.msra.mxu0 0.0
    %835 = vmatpush.msra.mxu0 0.0
    %836 = vmatpush.msra.mxu0 0.0
    %837 = vmatpush.msra.mxu0 0.0
    %838 = vmatpush.msra.mxu0 0.0
    %839 = vmatpush.msra.mxu0 %v36
    %840 = vmatpush.msra.mxu0 %v35
    %841 = vmatpush.msra.mxu0 %v34
    %842 = vmatpush.msra.mxu0 %v33
    %843 = vmatmul.f32.gmra.mxu0 %v825
    %v844 = vpop.f32.mrf.mxu0
    %v845 = vadd.f32 %v758, %v844
    %846 = vdwg.mxu0
    %v847 = vxor.u32 %v845, 2147483648
    %v848 = vmul.f32 %v847, 1.442695
    %v849 = vpow.pop %v848
    %v850 = vadd.f32 %v849, 1.0
    %v851 = vrcp.pop %v850
    %v852 = vmul.f32 %v850, %v851
    %v853 = vsub.f32 1.0, %v852
    %v854 = vmul.f32 %v851, %v853
    %v855 = vadd.f32 %v851, %v854
    %vm856 = vweird.f32 %v850
    %vm857 = vweird.f32 %v851
    %vm858 = vmor %vm856, %vm857
    %v859 = vsel %vm858, %v851, %v855
    %v860 = vand.u32 2147483647, %v850
    %vm861 = vcmp.eq.f32.partialorder %v860, 8.507059e+37
    %v862 = vand.u32 %v850, 2147483648
    %v863 = vor.u32 1.1754944e-38, %v862
    %v864 = vsel %vm861, %v863, %v859
    %v865 = vmul.f32 1.0, %v864
    %867 = vrot.lane.b32.xlu0 %v845, 32
    %v868 = vpop.permute.xlu0 %867
    %v870 = vmul.f32 %v865, %v868
    %872 = vrot.lane.b32.xlu0 %v870, 64
    %v873 = vpop.permute.xlu0 %872
    %v875 = vadd.f32 %v845, %v873
    %v876 = vtanh.pop %v875
    %v877 = vsub.f32 %v734, %v876
    %879 = vrot.lane.b32.xlu0 %v877, 96
    %v880 = vpop.permute.xlu0 %879
    %v882 = vmul.f32 %v865, %v880
    %884 = vrot.lane.b32.xlu0 %v882, 32
    %v885 = vpop.permute.xlu0 %884
    %v887 = vadd.f32 %v876, %v885
    %889 = vrot.lane.b32.xlu0 %v887, 64
    %v890 = vpop.permute.xlu0 %889
    %v891 = vsel %vm124, %v890, 0
    %893 = vmatpush.msra.mxu0 0.0
    %894 = vmatpush.msra.mxu0 0.0
    %895 = vmatpush.msra.mxu0 0.0
    %896 = vmatpush.msra.mxu0 0.0
    %897 = vmatpush.msra.mxu0 0.0
    %898 = vmatpush.msra.mxu0 0.0
    %899 = vmatpush.msra.mxu0 0.0
    %900 = vmatpush.msra.mxu0 0.0
    %901 = vmatpush.msra.mxu0 0.0
    %902 = vmatpush.msra.mxu0 0.0
    %903 = vmatpush.msra.mxu0 0.0
    %904 = vmatpush.msra.mxu0 0.0
    %905 = vmatpush.msra.mxu0 %v40
    %906 = vmatpush.msra.mxu0 %v39
    %907 = vmatpush.msra.mxu0 %v38
    %908 = vmatpush.msra.mxu0 %v37
    %909 = vmatmul.f32.gmra.mxu0 %v891
    %v910 = vpop.f32.mrf.mxu0
    %v911 = vadd.f32 %v123, %v910
    %912 = vdwg.mxu0
    %913 = vmatpush.msra.mxu0 0.0
    %914 = vmatpush.msra.mxu0 0.0
    %915 = vmatpush.msra.mxu0 0.0
    %916 = vmatpush.msra.mxu0 0.0
    %917 = vmatpush.msra.mxu0 0.0
    %918 = vmatpush.msra.mxu0 0.0
    %919 = vmatpush.msra.mxu0 0.0
    %920 = vmatpush.msra.mxu0 0.0
    %921 = vmatpush.msra.mxu0 0.0
    %922 = vmatpush.msra.mxu0 0.0
    %923 = vmatpush.msra.mxu0 0.0
    %924 = vmatpush.msra.mxu0 0.0
    %925 = vmatpush.msra.mxu0 %v32
    %926 = vmatpush.msra.mxu0 %v31
    %927 = vmatpush.msra.mxu0 %v30
    %928 = vmatpush.msra.mxu0 %v29
    %929 = vmatmul.f32.gmra.mxu0 %v825
    %v930 = vpop.f32.mrf.mxu0
    %v931 = vadd.f32 0.0, %v930
    %932 = vdwg.mxu0
    %v933 = vadd.f32 %v115, %v931
    %v934 = vxor.u32 %v933, 2147483648
    %v935 = vmul.f32 %v934, 1.442695
    %v936 = vpow.pop %v935
    %v937 = vadd.f32 %v936, 1.0
    %v938 = vrcp.pop %v937
    %v939 = vmul.f32 %v937, %v938
    %v940 = vsub.f32 1.0, %v939
    %v941 = vmul.f32 %v938, %v940
    %v942 = vadd.f32 %v938, %v941
    %vm943 = vweird.f32 %v937
    %vm944 = vweird.f32 %v938
    %vm945 = vmor %vm943, %vm944
    %v946 = vsel %vm945, %v938, %v942
    %v947 = vand.u32 2147483647, %v937
    %vm948 = vcmp.eq.f32.partialorder %v947, 8.507059e+37
    %v949 = vand.u32 %v937, 2147483648
    %v950 = vor.u32 1.1754944e-38, %v949
    %v951 = vsel %vm948, %v950, %v946
    %v952 = vmul.f32 1.0, %v951
    %954 = vrot.lane.b32.xlu0 %v933, 32
    %v955 = vpop.permute.xlu0 %954
    %v957 = vmul.f32 %v952, %v955
    %959 = vrot.lane.b32.xlu0 %v957, 64
    %v960 = vpop.permute.xlu0 %959
    %v962 = vadd.f32 %v933, %v960
    %v963 = vtanh.pop %v962
    %v964 = vsub.f32 %v821, %v963
    %966 = vrot.lane.b32.xlu0 %v964, 96
    %v967 = vpop.permute.xlu0 %966
    %v969 = vmul.f32 %v952, %v967
    %971 = vrot.lane.b32.xlu0 %v969, 32
    %v972 = vpop.permute.xlu0 %971
    %v974 = vadd.f32 %v963, %v972
    %976 = vrot.lane.b32.xlu0 %v974, 64
    %v977 = vpop.permute.xlu0 %976
    %v978 = vsel %vm124, %v977, 0
    %980 = vmatpush.msra.mxu0 0.0
    %981 = vmatpush.msra.mxu0 0.0
    %982 = vmatpush.msra.mxu0 0.0
    %983 = vmatpush.msra.mxu0 0.0
    %984 = vmatpush.msra.mxu0 0.0
    %985 = vmatpush.msra.mxu0 0.0
    %986 = vmatpush.msra.mxu0 0.0
    %987 = vmatpush.msra.mxu0 0.0
    %988 = vmatpush.msra.mxu0 0.0
    %989 = vmatpush.msra.mxu0 0.0
    %990 = vmatpush.msra.mxu0 0.0
    %991 = vmatpush.msra.mxu0 0.0
    %992 = vmatpush.msra.mxu0 %v36
    %993 = vmatpush.msra.mxu0 %v35
    %994 = vmatpush.msra.mxu0 %v34
    %995 = vmatpush.msra.mxu0 %v33
    %996 = vmatmul.f32.gmra.mxu0 %v978
    %v997 = vpop.f32.mrf.mxu0
    %v998 = vadd.f32 %v911, %v997
    %999 = vdwg.mxu0
    %v1000 = vxor.u32 %v998, 2147483648
    %v1001 = vmul.f32 %v1000, 1.442695
    %v1002 = vpow.pop %v1001
    %v1003 = vadd.f32 %v1002, 1.0
    %v1004 = vrcp.pop %v1003
    %v1005 = vmul.f32 %v1003, %v1004
    %v1006 = vsub.f32 1.0, %v1005
    %v1007 = vmul.f32 %v1004, %v1006
    %v1008 = vadd.f32 %v1004, %v1007
    %vm1009 = vweird.f32 %v1003
    %vm1010 = vweird.f32 %v1004
    %vm1011 = vmor %vm1009, %vm1010
    %v1012 = vsel %vm1011, %v1004, %v1008
    %v1013 = vand.u32 2147483647, %v1003
    %vm1014 = vcmp.eq.f32.partialorder %v1013, 8.507059e+37
    %v1015 = vand.u32 %v1003, 2147483648
    %v1016 = vor.u32 1.1754944e-38, %v1015
    %v1017 = vsel %vm1014, %v1016, %v1012
    %v1018 = vmul.f32 1.0, %v1017
    %1020 = vrot.lane.b32.xlu0 %v998, 32
    %v1021 = vpop.permute.xlu0 %1020
    %v1023 = vmul.f32 %v1018, %v1021
    %1025 = vrot.lane.b32.xlu0 %v1023, 64
    %v1026 = vpop.permute.xlu0 %1025
    %v1028 = vadd.f32 %v998, %v1026
    %v1029 = vtanh.pop %v1028
    %v1030 = vsub.f32 %v887, %v1029
    %1032 = vrot.lane.b32.xlu0 %v1030, 96
    %v1033 = vpop.permute.xlu0 %1032
    %v1035 = vmul.f32 %v1018, %v1033
    %1037 = vrot.lane.b32.xlu0 %v1035, 32
    %v1038 = vpop.permute.xlu0 %1037
    %v1040 = vadd.f32 %v1029, %v1038
    %1042 = vrot.lane.b32.xlu0 %v1040, 64
    %v1043 = vpop.permute.xlu0 %1042
    %v1044 = vsel %vm124, %v1043, 0
    %1046 = vmatpush.msra.mxu0 0.0
    %1047 = vmatpush.msra.mxu0 0.0
    %1048 = vmatpush.msra.mxu0 0.0
    %1049 = vmatpush.msra.mxu0 0.0
    %1050 = vmatpush.msra.mxu0 0.0
    %1051 = vmatpush.msra.mxu0 0.0
    %1052 = vmatpush.msra.mxu0 0.0
    %1053 = vmatpush.msra.mxu0 0.0
    %1054 = vmatpush.msra.mxu0 0.0
    %1055 = vmatpush.msra.mxu0 0.0
    %1056 = vmatpush.msra.mxu0 0.0
    %1057 = vmatpush.msra.mxu0 0.0
    %1058 = vmatpush.msra.mxu0 %v40
    %1059 = vmatpush.msra.mxu0 %v39
    %1060 = vmatpush.msra.mxu0 %v38
    %1061 = vmatpush.msra.mxu0 %v37
    %1062 = vmatmul.f32.gmra.mxu0 %v1044
    %v1063 = vpop.f32.mrf.mxu0
    %v1064 = vadd.f32 %v123, %v1063
    %1065 = vdwg.mxu0
    %1066 = vmatpush.msra.mxu0 0.0
    %1067 = vmatpush.msra.mxu0 0.0
    %1068 = vmatpush.msra.mxu0 0.0
    %1069 = vmatpush.msra.mxu0 0.0
    %1070 = vmatpush.msra.mxu0 0.0
    %1071 = vmatpush.msra.mxu0 0.0
    %1072 = vmatpush.msra.mxu0 0.0
    %1073 = vmatpush.msra.mxu0 0.0
    %1074 = vmatpush.msra.mxu0 0.0
    %1075 = vmatpush.msra.mxu0 0.0
    %1076 = vmatpush.msra.mxu0 0.0
    %1077 = vmatpush.msra.mxu0 0.0
    %1078 = vmatpush.msra.mxu0 %v32
    %1079 = vmatpush.msra.mxu0 %v31
    %1080 = vmatpush.msra.mxu0 %v30
    %1081 = vmatpush.msra.mxu0 %v29
    %1082 = vmatmul.f32.gmra.mxu0 %v978
    %v1083 = vpop.f32.mrf.mxu0
    %v1084 = vadd.f32 0.0, %v1083
    %1085 = vdwg.mxu0
    %v1086 = vadd.f32 %v118, %v1084
    %v1087 = vxor.u32 %v1086, 2147483648
    %v1088 = vmul.f32 %v1087, 1.442695
    %v1089 = vpow.pop %v1088
    %v1090 = vadd.f32 %v1089, 1.0
    %v1091 = vrcp.pop %v1090
    %v1092 = vmul.f32 %v1090, %v1091
    %v1093 = vsub.f32 1.0, %v1092
    %v1094 = vmul.f32 %v1091, %v1093
    %v1095 = vadd.f32 %v1091, %v1094
    %vm1096 = vweird.f32 %v1090
    %vm1097 = vweird.f32 %v1091
    %vm1098 = vmor %vm1096, %vm1097
    %v1099 = vsel %vm1098, %v1091, %v1095
    %v1100 = vand.u32 2147483647, %v1090
    %vm1101 = vcmp.eq.f32.partialorder %v1100, 8.507059e+37
    %v1102 = vand.u32 %v1090, 2147483648
    %v1103 = vor.u32 1.1754944e-38, %v1102
    %v1104 = vsel %vm1101, %v1103, %v1099
    %v1105 = vmul.f32 1.0, %v1104
    %1107 = vrot.lane.b32.xlu0 %v1086, 32
    %v1108 = vpop.permute.xlu0 %1107
    %v1110 = vmul.f32 %v1105, %v1108
    %1112 = vrot.lane.b32.xlu0 %v1110, 64
    %v1113 = vpop.permute.xlu0 %1112
    %v1115 = vadd.f32 %v1086, %v1113
    %v1116 = vtanh.pop %v1115
    %v1117 = vsub.f32 %v974, %v1116
    %1119 = vrot.lane.b32.xlu0 %v1117, 96
    %v1120 = vpop.permute.xlu0 %1119
    %v1122 = vmul.f32 %v1105, %v1120
    %1124 = vrot.lane.b32.xlu0 %v1122, 32
    %v1125 = vpop.permute.xlu0 %1124
    %v1127 = vadd.f32 %v1116, %v1125
    %1129 = vrot.lane.b32.xlu0 %v1127, 64
    %v1130 = vpop.permute.xlu0 %1129
    %v1131 = vsel %vm124, %v1130, 0
    %1133 = vmatpush.msra.mxu0 0.0
    %1134 = vmatpush.msra.mxu0 0.0
    %1135 = vmatpush.msra.mxu0 0.0
    %1136 = vmatpush.msra.mxu0 0.0
    %1137 = vmatpush.msra.mxu0 0.0
    %1138 = vmatpush.msra.mxu0 0.0
    %1139 = vmatpush.msra.mxu0 0.0
    %1140 = vmatpush.msra.mxu0 0.0
    %1141 = vmatpush.msra.mxu0 0.0
    %1142 = vmatpush.msra.mxu0 0.0
    %1143 = vmatpush.msra.mxu0 0.0
    %1144 = vmatpush.msra.mxu0 0.0
    %1145 = vmatpush.msra.mxu0 %v36
    %1146 = vmatpush.msra.mxu0 %v35
    %1147 = vmatpush.msra.mxu0 %v34
    %1148 = vmatpush.msra.mxu0 %v33
    %1149 = vmatmul.f32.gmra.mxu0 %v1131
    %v1150 = vpop.f32.mrf.mxu0
    %v1151 = vadd.f32 %v1064, %v1150
    %1152 = vdwg.mxu0
    %v1153 = vxor.u32 %v1151, 2147483648
    %v1154 = vmul.f32 %v1153, 1.442695
    %v1155 = vpow.pop %v1154
    %v1156 = vadd.f32 %v1155, 1.0
    %v1157 = vrcp.pop %v1156
    %v1158 = vmul.f32 %v1156, %v1157
    %v1159 = vsub.f32 1.0, %v1158
    %v1160 = vmul.f32 %v1157, %v1159
    %v1161 = vadd.f32 %v1157, %v1160
    %vm1162 = vweird.f32 %v1156
    %vm1163 = vweird.f32 %v1157
    %vm1164 = vmor %vm1162, %vm1163
    %v1165 = vsel %vm1164, %v1157, %v1161
    %v1166 = vand.u32 2147483647, %v1156
    %vm1167 = vcmp.eq.f32.partialorder %v1166, 8.507059e+37
    %v1168 = vand.u32 %v1156, 2147483648
    %v1169 = vor.u32 1.1754944e-38, %v1168
    %v1170 = vsel %vm1167, %v1169, %v1165
    %v1171 = vmul.f32 1.0, %v1170
    %1173 = vrot.lane.b32.xlu0 %v1151, 32
    %v1174 = vpop.permute.xlu0 %1173
    %v1176 = vmul.f32 %v1171, %v1174
    %1178 = vrot.lane.b32.xlu0 %v1176, 64
    %v1179 = vpop.permute.xlu0 %1178
    %v1181 = vadd.f32 %v1151, %v1179
    %v1182 = vtanh.pop %v1181
    %v1183 = vsub.f32 %v1040, %v1182
    %1185 = vrot.lane.b32.xlu0 %v1183, 96
    %v1186 = vpop.permute.xlu0 %1185
    %v1188 = vmul.f32 %v1171, %v1186
    %1190 = vrot.lane.b32.xlu0 %v1188, 32
    %v1191 = vpop.permute.xlu0 %1190
    %v1193 = vadd.f32 %v1182, %v1191
    %1195 = vrot.lane.b32.xlu0 %v1193, 64
    %v1196 = vpop.permute.xlu0 %1195
    %v1197 = vsel %vm124, %v1196, 0
    %1199 = vmatpush.msra.mxu0 0.0
    %1200 = vmatpush.msra.mxu0 0.0
    %1201 = vmatpush.msra.mxu0 0.0
    %1202 = vmatpush.msra.mxu0 0.0
    %1203 = vmatpush.msra.mxu0 0.0
    %1204 = vmatpush.msra.mxu0 0.0
    %1205 = vmatpush.msra.mxu0 0.0
    %1206 = vmatpush.msra.mxu0 0.0
    %1207 = vmatpush.msra.mxu0 0.0
    %1208 = vmatpush.msra.mxu0 0.0
    %1209 = vmatpush.msra.mxu0 0.0
    %1210 = vmatpush.msra.mxu0 0.0
    %1211 = vmatpush.msra.mxu0 %v40
    %1212 = vmatpush.msra.mxu0 %v39
    %1213 = vmatpush.msra.mxu0 %v38
    %1214 = vmatpush.msra.mxu0 %v37
    %1215 = vmatmul.f32.gmra.mxu0 %v1197
    %v1216 = vpop.f32.mrf.mxu0
    %v1217 = vadd.f32 %v123, %v1216
    %1218 = vdwg.mxu0
    %1219 = vmatpush.msra.mxu0 0.0
    %1220 = vmatpush.msra.mxu0 0.0
    %1221 = vmatpush.msra.mxu0 0.0
    %1222 = vmatpush.msra.mxu0 0.0
    %1223 = vmatpush.msra.mxu0 0.0
    %1224 = vmatpush.msra.mxu0 0.0
    %1225 = vmatpush.msra.mxu0 0.0
    %1226 = vmatpush.msra.mxu0 0.0
    %1227 = vmatpush.msra.mxu0 0.0
    %1228 = vmatpush.msra.mxu0 0.0
    %1229 = vmatpush.msra.mxu0 0.0
    %1230 = vmatpush.msra.mxu0 0.0
    %1231 = vmatpush.msra.mxu0 %v32
    %1232 = vmatpush.msra.mxu0 %v31
    %1233 = vmatpush.msra.mxu0 %v30
    %1234 = vmatpush.msra.mxu0 %v29
    %1235 = vmatmul.f32.gmra.mxu0 %v1131
    %v1236 = vpop.f32.mrf.mxu0
    %v1237 = vadd.f32 0.0, %v1236
    %1238 = vdwg.mxu0
    %v1239 = vadd.f32 %v121, %v1237
    %v1240 = vxor.u32 %v1239, 2147483648
    %v1241 = vmul.f32 %v1240, 1.442695
    %v1242 = vpow.pop %v1241
    %v1243 = vadd.f32 %v1242, 1.0
    %v1244 = vrcp.pop %v1243
    %v1245 = vmul.f32 %v1243, %v1244
    %v1246 = vsub.f32 1.0, %v1245
    %v1247 = vmul.f32 %v1244, %v1246
    %v1248 = vadd.f32 %v1244, %v1247
    %vm1249 = vweird.f32 %v1243
    %vm1250 = vweird.f32 %v1244
    %vm1251 = vmor %vm1249, %vm1250
    %v1252 = vsel %vm1251, %v1244, %v1248
    %v1253 = vand.u32 2147483647, %v1243
    %vm1254 = vcmp.eq.f32.partialorder %v1253, 8.507059e+37
    %v1255 = vand.u32 %v1243, 2147483648
    %v1256 = vor.u32 1.1754944e-38, %v1255
    %v1257 = vsel %vm1254, %v1256, %v1252
    %v1258 = vmul.f32 1.0, %v1257
    %1260 = vrot.lane.b32.xlu0 %v1239, 32
    %v1261 = vpop.permute.xlu0 %1260
    %v1263 = vmul.f32 %v1258, %v1261
    %1265 = vrot.lane.b32.xlu0 %v1263, 64
    %v1266 = vpop.permute.xlu0 %1265
    %v1268 = vadd.f32 %v1239, %v1266
    %v1269 = vtanh.pop %v1268
    %v1270 = vsub.f32 %v1127, %v1269
    %1272 = vrot.lane.b32.xlu0 %v1270, 96
    %v1273 = vpop.permute.xlu0 %1272
    %v1275 = vmul.f32 %v1258, %v1273
    %1277 = vrot.lane.b32.xlu0 %v1275, 32
    %v1278 = vpop.permute.xlu0 %1277
    %v1280 = vadd.f32 %v1269, %v1278
    %1282 = vrot.lane.b32.xlu0 %v1280, 64
    %v1283 = vpop.permute.xlu0 %1282
    %v1284 = vsel %vm124, %v1283, 0
    %1286 = vmatpush.msra.mxu0 0.0
    %1287 = vmatpush.msra.mxu0 0.0
    %1288 = vmatpush.msra.mxu0 0.0
    %1289 = vmatpush.msra.mxu0 0.0
    %1290 = vmatpush.msra.mxu0 0.0
    %1291 = vmatpush.msra.mxu0 0.0
    %1292 = vmatpush.msra.mxu0 0.0
    %1293 = vmatpush.msra.mxu0 0.0
    %1294 = vmatpush.msra.mxu0 0.0
    %1295 = vmatpush.msra.mxu0 0.0
    %1296 = vmatpush.msra.mxu0 0.0
    %1297 = vmatpush.msra.mxu0 0.0
    %1298 = vmatpush.msra.mxu0 %v36
    %1299 = vmatpush.msra.mxu0 %v35
    %1300 = vmatpush.msra.mxu0 %v34
    %1301 = vmatpush.msra.mxu0 %v33
    %1302 = vmatmul.f32.gmra.mxu0 %v1284
    %v1303 = vpop.f32.mrf.mxu0
    %v1304 = vadd.f32 %v1217, %v1303
    %1305 = vdwg.mxu0
    %v1306 = vxor.u32 %v1304, 2147483648
    %v1307 = vmul.f32 %v1306, 1.442695
    %v1308 = vpow.pop %v1307
    %v1309 = vadd.f32 %v1308, 1.0
    %v1310 = vrcp.pop %v1309
    %v1311 = vmul.f32 %v1309, %v1310
    %v1312 = vsub.f32 1.0, %v1311
    %v1313 = vmul.f32 %v1310, %v1312
    %v1314 = vadd.f32 %v1310, %v1313
    %vm1315 = vweird.f32 %v1309
    %vm1316 = vweird.f32 %v1310
    %vm1317 = vmor %vm1315, %vm1316
    %v1318 = vsel %vm1317, %v1310, %v1314
    %v1319 = vand.u32 2147483647, %v1309
    %vm1320 = vcmp.eq.f32.partialorder %v1319, 8.507059e+37
    %v1321 = vand.u32 %v1309, 2147483648
    %v1322 = vor.u32 1.1754944e-38, %v1321
    %v1323 = vsel %vm1320, %v1322, %v1318
    %v1324 = vmul.f32 1.0, %v1323
    %1326 = vrot.lane.b32.xlu0 %v1304, 32
    %v1327 = vpop.permute.xlu0 %1326
    %v1329 = vmul.f32 %v1324, %v1327
    %1331 = vrot.lane.b32.xlu0 %v1329, 64
    %v1332 = vpop.permute.xlu0 %1331
    %v1334 = vadd.f32 %v1304, %v1332
    %v1335 = vtanh.pop %v1334
    %v1336 = vsub.f32 %v1193, %v1335
    %1338 = vrot.lane.b32.xlu0 %v1336, 96
    %v1339 = vpop.permute.xlu0 %1338
    %v1341 = vmul.f32 %v1324, %v1339
    %1343 = vrot.lane.b32.xlu0 %v1341, 32
    %v1344 = vpop.permute.xlu0 %1343
    %v1346 = vadd.f32 %v1335, %v1344
    %v1348 = vsel %vm57, %v55, 0
    %1350 = vmatpush.msra.mxu0 0.0
    %1351 = vmatpush.msra.mxu0 0.0
    %1352 = vmatpush.msra.mxu0 0.0
    %1353 = vmatpush.msra.mxu0 0.0
    %1354 = vmatpush.msra.mxu0 0.0
    %1355 = vmatpush.msra.mxu0 0.0
    %1356 = vmatpush.msra.mxu0 0.0
    %1357 = vmatpush.msra.mxu0 0.0
    %1358 = vmatpush.msra.mxu0 0.0
    %1359 = vmatpush.msra.mxu0 0.0
    %1360 = vmatpush.msra.mxu0 0.0
    %1361 = vmatpush.msra.mxu0 0.0
    %1362 = vmatpush.msra.mxu0 0.0
    %1363 = vmatpush.msra.mxu0 0.0
    %1364 = vmatpush.msra.mxu0 0.0
    %1365 = vmatpush.msra.mxu0 %v45
    %1366 = vmatmul.f32.gmra.mxu0 %v1348
    %v1367 = vpop.f32.mrf.mxu0
    %v1368 = vadd.f32 0.0, %v1367
    %1369 = vdwg.mxu0
    %1371 = vrot.lane.b32.xlu0 %v1346, 64
    %v1372 = vpop.permute.xlu0 %1371
    %v1373 = vsel %vm124, %v1372, 0
    %1375 = vmatpush.msra.mxu0 0.0
    %1376 = vmatpush.msra.mxu0 0.0
    %1377 = vmatpush.msra.mxu0 0.0
    %1378 = vmatpush.msra.mxu0 0.0
    %1379 = vmatpush.msra.mxu0 0.0
    %1380 = vmatpush.msra.mxu0 0.0
    %1381 = vmatpush.msra.mxu0 0.0
    %1382 = vmatpush.msra.mxu0 0.0
    %1383 = vmatpush.msra.mxu0 0.0
    %1384 = vmatpush.msra.mxu0 0.0
    %1385 = vmatpush.msra.mxu0 0.0
    %1386 = vmatpush.msra.mxu0 0.0
    %1387 = vmatpush.msra.mxu0 %v44
    %1388 = vmatpush.msra.mxu0 %v43
    %1389 = vmatpush.msra.mxu0 %v42
    %1390 = vmatpush.msra.mxu0 %v41
    %1391 = vmatmul.f32.gmra.mxu0 %v1373
    %v1392 = vpop.f32.mrf.mxu0
    %v1393 = vadd.f32 %v1368, %v1392
    %1394 = vdwg.mxu0
    %v1395 = vperm.slane %v46, 2
    %v1396 = vadd.f32 %v1393, %v1395
    %1397 = vst [vmem:[#allocation5] sm:$0xff] %v1396
    // Predicated region
    $region14: #{tpu_custom_call.1} parent=1 // pred_check
      _
    $region15: #{tpu_custom_call.1} parent=1 // pred_check_branch
      %1399 = sbr.rel (0) target = $region17
    $region16: #{tpu_custom_call.1} parent=1 // pred_region
      %1401 = vsyncadd [#allocation4], 0
      %s1403 = sshll.u32 [#allocation5], 4
      %s1404 = int_to_ptr.vmem [resolvable:$true] %s1403
      %s1405 = sshll.u32 %s2, 4
      %s1406 = int_to_ptr.hbm [resolvable:$true] %s1405
      %1408 = dma.vmem_to_hbm [thread:$0]  %s1404, 128, %s1406, [#allocation4]
    $region17: #{tpu_custom_call.1} parent=1 // pred_fallthru
      _
    // Predicated region
    $region18: #{tpu_custom_call.1} parent=1 // pred_check
      _
    $region19: #{tpu_custom_call.1} parent=1 // pred_check_branch
      %1410 = sbr.rel (0) target = $region21
    $region20: #{tpu_custom_call.1} parent=1 // pred_region
      %1412 = dma.done [#allocation4], 128
    $region21: #{tpu_custom_call.1} parent=1 // pred_fallthru
      _
    %1413 = vsyncpa [#allocation3], 1
    %1414 = vsyncpa [#allocation4], 1

</llo_original>
